<compile_context>
chip_gen: v7x
topology: tpu7x:2x2x1
jax: 0.10.0
libtpu: 0.0.40
codegen_flags: <defaults>
</compile_context>

<pallas_src>
import math
import random
from functools import partial

import numpy as np

import jax
import jax.numpy as jnp
from jax import lax
from jax.experimental import pallas as pl
from jax.experimental.pallas import tpu as pltpu

FREQ_MASKS = 2
TIME_MASKS_FRAC = 0.05
FREQ_WIDTH = 27
TIME_WIDTH_FRAC = 0.05
MAX_TIME_MASKS = 10
MASK_VALUE = 0.0

# Per-block byte target: double-buffered in+out blocks => ~4x this in VMEM,
# comfortably under the explicit 32 MiB scoped limit requested below (which is
# itself safe on every generation: v5e/v6e 128 MiB, v7x 64 MiB physical VMEM).
_BLOCK_BYTES = 4 << 20
_VMEM_LIMIT = 32 << 20


def _round_up(x, m):
    return (x + m - 1) // m * m


def _choose_rows(total_rows, row_bytes, itemsize, batch):
    """Rows per block: biggest block <= _BLOCK_BYTES, a multiple of the dtype's
    sublane packing (8/16/32 rows for 4/2/1-byte dtypes), whole-axis when it
    fits, and >=2 grid steps when batch == 1 (v7x megacore)."""
    sub = max(8, 32 // max(1, itemsize))
    budget_rows = max(sub, (_BLOCK_BYTES // max(1, row_bytes)) // sub * sub)
    rows = min(budget_rows, _round_up(total_rows, sub))
    if batch == 1 and total_rows > sub:
        rows = min(rows, _round_up(pl.cdiv(total_rows, 2), sub))
    if rows >= total_rows:
        return total_rows            # single whole-axis block (always legal)
    return rows


def _specaug_grouped_kernel(fstart_ref, fwidth_ref, tstart_ref, twidth_ref,
                            x_ref, o_ref, *, F, g):
    """Lane-dense path: input was reshaped [B,T,F] -> [B, T//g, F*g] so the
    lane dim is a multiple of 128.  Lane l of grouped row R holds the original
    frame t = g*R + (l // F), frequency bin (l % F)."""
    b = pl.program_id(0)
    TT, FL = x_ref.shape                   # batch dim squeezed by the BlockSpec
    r0 = pl.program_id(1) * TT             # grouped-row offset of this tile

    # Per-lane (1, FL) frequency bin and row-within-group, built from compares
    # and adds only (no integer div/mod inside the kernel).
    lane = lax.broadcasted_iota(jnp.int32, (1, FL), 1)
    grp = jnp.zeros((1, FL), jnp.int32)
    for c in range(1, g):
        grp = grp + (lane >= c * F).astype(jnp.int32)
    freq = lane - grp * F

    # Frequency keep mask as 0/1 ints (doubles as the bit-0 mask below).
    f_keep = jnp.ones((1, FL), jnp.int32)
    for i in range(FREQ_MASKS):
        s = fstart_ref[b * FREQ_MASKS + i]
        w = fwidth_ref[b * FREQ_MASKS + i]
        f_keep = jnp.where((freq >= s) & (freq < s + w), 0, f_keep)

    # Time keep mask at (grouped-row, row-within-group) granularity, then
    # bit-packed into one int32 per grouped row: O(TT*g) work, not O(TT*FL).
    row = lax.broadcasted_iota(jnp.int32, (TT, g), 0) + r0
    col = lax.broadcasted_iota(jnp.int32, (TT, g), 1)
    t = row * g + col                       # absolute frame index
    t_keep = jnp.ones((TT, g), jnp.int32)
    for i in range(MAX_TIME_MASKS):
        s = tstart_ref[b * MAX_TIME_MASKS + i]
        w = twidth_ref[b * MAX_TIME_MASKS + i]   # width 0 => unused slot
        t_keep = jnp.where((t >= s) & (t < s + w), 0, t_keep)
    bits = jnp.sum(t_keep << col, axis=1, keepdims=True)     # (TT, 1) int32

    # Per element: shift + and + cmp + select (~4 VPU ops) -> HBM-bound.
    x = x_ref[...]
    keep = ((bits >> grp) & f_keep) != 0
    o_ref[...] = jnp.where(keep, x, jnp.asarray(MASK_VALUE, dtype=x.dtype))


def _specaug_plain_kernel(fstart_ref, fwidth_ref, tstart_ref, twidth_ref,
                          x_ref, o_ref):
    """Fallback (no free lane-dense fold): block is (TT, F) with the full,
    unpadded F as the lane dim; factored masks, ~2 VPU ops/element."""
    b = pl.program_id(0)
    TT, F = x_ref.shape
    t0 = pl.program_id(1) * TT

    f_idx = lax.broadcasted_iota(jnp.int32, (1, F), 1)
    f_keep = jnp.ones((1, F), jnp.bool_)
    for i in range(FREQ_MASKS):
        s = fstart_ref[b * FREQ_MASKS + i]
        w = fwidth_ref[b * FREQ_MASKS + i]
        f_keep = f_keep & jnp.logical_not((f_idx >= s) & (f_idx < s + w))

    t_idx = lax.broadcasted_iota(jnp.int32, (TT, 1), 0) + t0
    t_keep = jnp.ones((TT, 1), jnp.bool_)
    for i in range(MAX_TIME_MASKS):
        s = tstart_ref[b * MAX_TIME_MASKS + i]
        w = twidth_ref[b * MAX_TIME_MASKS + i]   # width 0 => unused slot
        t_keep = t_keep & jnp.logical_not((t_idx >= s) & (t_idx < s + w))

    x = x_ref[...]
    o_ref[...] = jnp.where(t_keep & f_keep, x,
                           jnp.asarray(MASK_VALUE, dtype=x.dtype))


def make_mask_tables(lengths, num_freq_bins, seed=0):
    """Host-side mirror of the torch module's random.Random logic (run once,
    off the hot path).  Returns flat 1-D int32 tables (1-D SMEM arrays pad far
    less than 2-D ones): f_start/f_width of shape (B*FREQ_MASKS,),
    t_start/t_width of shape (B*MAX_TIME_MASKS,); unused slots have width 0."""
    rng = random.Random(seed)
    lengths = [int(v) for v in np.asarray(lengths).reshape(-1)]
    B = len(lengths)
    f_start = np.zeros((B, FREQ_MASKS), np.int32)
    f_width = np.zeros((B, FREQ_MASKS), np.int32)
    t_start = np.zeros((B, MAX_TIME_MASKS), np.int32)
    t_width = np.zeros((B, MAX_TIME_MASKS), np.int32)
    for idx in range(B):
        for i in range(FREQ_MASKS):
            f_start[idx, i] = rng.randint(0, max(0, num_freq_bins - FREQ_WIDTH))
            f_width[idx, i] = rng.randint(0, FREQ_WIDTH)
        n_time = min(MAX_TIME_MASKS, int(lengths[idx] * TIME_MASKS_FRAC))
        for i in range(n_time):
            tw = max(1, int(lengths[idx] * TIME_WIDTH_FRAC))
            t_start[idx, i] = rng.randint(0, max(1, lengths[idx] - tw))
            t_width[idx, i] = rng.randint(0, tw)
    return tuple(jnp.asarray(a.reshape(-1))
                 for a in (f_start, f_width, t_start, t_width))


@partial(jax.jit, donate_argnums=(0,))
def apply_spec_augment(input_spec, f_start, f_width, t_start, t_width):
    """Jit hot path.  `input_spec` is donated and masked in place (the pallas
    output aliases it), matching the torch module's in-place semantics."""
    B, T, F = input_spec.shape
    itemsize = jnp.dtype(input_spec.dtype).itemsize

    # Lane-dense layout: fold g frames into the lane dim when the reshape is a
    # free contiguous bitcast (g = 128/gcd(F,128); F*g is a multiple of 128).
    g = 128 // math.gcd(int(F), 128) if F > 0 else 1
    grouped = (1 < g <= 32) and (T % g == 0)
    if grouped:
        rows_total, FL = T // g, F * g
        x = input_spec.reshape(B, rows_total, FL)   # contiguous: no data movement
        kernel = partial(_specaug_grouped_kernel, F=int(F), g=int(g))
    else:
        rows_total, FL = T, F
        x = input_spec
        kernel = _specaug_plain_kernel

    rows = _choose_rows(rows_total, FL * itemsize, itemsize, B)
    grid = (B, pl.cdiv(rows_total, rows))   # partial last block masked by Pallas

    in_spec = pl.BlockSpec((pl.Squeezed(), rows, FL),
                           lambda b, t, fs, fw, ts, tw: (b, t, 0))
    out_spec = pl.BlockSpec((pl.Squeezed(), rows, FL),
                            lambda b, t, fs, fw, ts, tw: (b, t, 0))

    out = pl.pallas_call(
        kernel,
        out_shape=jax.ShapeDtypeStruct((B, rows_total, FL), x.dtype),
        grid_spec=pltpu.PrefetchScalarGridSpec(
            num_scalar_prefetch=4,
            grid=grid,
            in_specs=[in_spec],
            out_specs=out_spec,
        ),
        # x is operand index 4 (after the 4 scalar-prefetch tables); alias it
        # to the output so the op runs in place on the donated buffer.
        input_output_aliases={4: 0},
        compiler_params=pltpu.CompilerParams(
            dimension_semantics=("parallel", "parallel"),
            vmem_limit_bytes=_VMEM_LIMIT),
    )(f_start, f_width, t_start, t_width, x)

    if grouped:
        out = out.reshape(B, T, F)
    return out


def adaptive_spec_augment(input_spec, length, seed=0):
    """Module-like wrapper: [B,T,F] spec + [B] lengths -> (masked, length).
    Does a one-time host sync of `length` for the Python RNG (as the torch
    module does implicitly); `input_spec` is donated/overwritten (torch masks
    in place).  For jit hot loops, build the tables once with make_mask_tables
    and call apply_spec_augment directly."""
    lengths_host = np.asarray(jax.device_get(length))
    tables = make_mask_tables(lengths_host, int(input_spec.shape[2]), seed)
    return apply_spec_augment(input_spec, *tables), length


if __name__ == "__main__":
    key = jax.random.PRNGKey(0)
    B, T, F = 2, 1536, 80                 # ~15s of 10ms frames, 80 mel bins
    x = jax.random.normal(key, (B, T, F), dtype=jnp.float32)
    x_np = np.asarray(x)                  # host snapshot before donation
    lengths_host = [1200, 1536]
    length = jnp.asarray(lengths_host, dtype=jnp.int32)

    # Off-hot-path host RNG (mirrors the torch module), then the jitted apply.
    tables = make_mask_tables(lengths_host, F, seed=0)
    masked = apply_spec_augment(x, *tables)           # x is donated (in place)
    jax.block_until_ready(masked)

    # Correctness: numpy mirror of the torch in-place masking (grouped path).
    ref = x_np.copy()
    fs, fw = (np.asarray(a).reshape(B, -1) for a in tables[:2])
    ts, tw = (np.asarray(a).reshape(B, -1) for a in tables[2:])
    for b in range(B):
        for i in range(FREQ_MASKS):
            ref[b, :, fs[b, i]:fs[b, i] + fw[b, i]] = MASK_VALUE
        for i in range(MAX_TIME_MASKS):
            ref[b, ts[b, i]:ts[b, i] + tw[b, i], :] = MASK_VALUE
    np.testing.assert_array_equal(np.asarray(masked), ref)

    # Also exercise the un-grouped fallback (T % 8 != 0) with a partial
    # boundary block and the B==1 megacore time split.
    T2 = 301
    x2 = jax.random.normal(jax.random.PRNGKey(1), (1, T2, F), dtype=jnp.float32)
    x2_np = np.asarray(x2)
    tables2 = make_mask_tables([T2], F, seed=1)
    masked2 = apply_spec_augment(x2, *tables2)
    jax.block_until_ready(masked2)
    ref2 = x2_np.copy()
    fs2, fw2 = (np.asarray(a).reshape(1, -1) for a in tables2[:2])
    ts2, tw2 = (np.asarray(a).reshape(1, -1) for a in tables2[2:])
    for i in range(FREQ_MASKS):
        ref2[0, :, fs2[0, i]:fs2[0, i] + fw2[0, i]] = MASK_VALUE
    for i in range(MAX_TIME_MASKS):
        ref2[0, ts2[0, i]:ts2[0, i] + tw2[0, i], :] = MASK_VALUE
    np.testing.assert_array_equal(np.asarray(masked2), ref2)

    # Module-like wrapper (one-time host sync for the RNG, off the hot path).
    x3 = jnp.asarray(x_np)
    masked3, length_out = adaptive_spec_augment(x3, length, seed=0)
    jax.block_until_ready(masked3)
    jax.block_until_ready(length_out)
    np.testing.assert_array_equal(np.asarray(masked3), ref)

    print("KERNEL_OK")
</pallas_src>

<mosaic_0001>
module attributes {stable_mosaic.version = 11 : i64} {
  func.func @_specaug_grouped_kernel(%arg0: i32, %arg1: i32, %arg2: memref<4xi32, #tpu.memory_space<smem>>, %arg3: memref<4xi32, #tpu.memory_space<smem>>, %arg4: memref<20xi32, #tpu.memory_space<smem>>, %arg5: memref<20xi32, #tpu.memory_space<smem>>, %arg6: memref<1x192x640xf32, #tpu.memory_space<vmem>>, %arg7: memref<1x192x640xf32, #tpu.memory_space<vmem>>) attributes {dimension_semantics = [#tpu.dimension_semantics<parallel>, #tpu.dimension_semantics<parallel>], iteration_bounds = array<i64: 2, 1>, scalar_prefetch = 4 : i64, scratch_operands = 0 : i64, tpu.core_type = #tpu.core_type<tc>, window_params = [{transform_indices = @transform_0, window_bounds = array<i64: 1, 192, 640>}, {transform_indices = @transform_1, window_bounds = array<i64: 1, 192, 640>}]} {
    %c192_i32 = arith.constant 192 : i32
    %0 = arith.muli %arg1, %c192_i32 : i32
    %1 = tpu.iota {dimensions = array<i32: 1>} : vector<1x640xi32>
    %c0_i32 = arith.constant 0 : i32
    %2 = vector.broadcast %c0_i32 : i32 to vector<1x640xi32>
    %c80_i32 = arith.constant 80 : i32
    %3 = vector.broadcast %c80_i32 : i32 to vector<1x640xi32>
    %4 = arith.cmpi sge, %1, %3 : vector<1x640xi32>
    %5 = arith.extui %4 : vector<1x640xi1> to vector<1x640xi32>
    %6 = arith.addi %2, %5 : vector<1x640xi32>
    %c160_i32 = arith.constant 160 : i32
    %7 = vector.broadcast %c160_i32 : i32 to vector<1x640xi32>
    %8 = arith.cmpi sge, %1, %7 : vector<1x640xi32>
    %9 = arith.extui %8 : vector<1x640xi1> to vector<1x640xi32>
    %10 = arith.addi %6, %9 : vector<1x640xi32>
    %c240_i32 = arith.constant 240 : i32
    %11 = vector.broadcast %c240_i32 : i32 to vector<1x640xi32>
    %12 = arith.cmpi sge, %1, %11 : vector<1x640xi32>
    %13 = arith.extui %12 : vector<1x640xi1> to vector<1x640xi32>
    %14 = arith.addi %10, %13 : vector<1x640xi32>
    %c320_i32 = arith.constant 320 : i32
    %15 = vector.broadcast %c320_i32 : i32 to vector<1x640xi32>
    %16 = arith.cmpi sge, %1, %15 : vector<1x640xi32>
    %17 = arith.extui %16 : vector<1x640xi1> to vector<1x640xi32>
    %18 = arith.addi %14, %17 : vector<1x640xi32>
    %c400_i32 = arith.constant 400 : i32
    %19 = vector.broadcast %c400_i32 : i32 to vector<1x640xi32>
    %20 = arith.cmpi sge, %1, %19 : vector<1x640xi32>
    %21 = arith.extui %20 : vector<1x640xi1> to vector<1x640xi32>
    %22 = arith.addi %18, %21 : vector<1x640xi32>
    %c480_i32 = arith.constant 480 : i32
    %23 = vector.broadcast %c480_i32 : i32 to vector<1x640xi32>
    %24 = arith.cmpi sge, %1, %23 : vector<1x640xi32>
    %25 = arith.extui %24 : vector<1x640xi1> to vector<1x640xi32>
    %26 = arith.addi %22, %25 : vector<1x640xi32>
    %c560_i32 = arith.constant 560 : i32
    %27 = vector.broadcast %c560_i32 : i32 to vector<1x640xi32>
    %28 = arith.cmpi sge, %1, %27 : vector<1x640xi32>
    %29 = arith.extui %28 : vector<1x640xi1> to vector<1x640xi32>
    %30 = arith.addi %26, %29 : vector<1x640xi32>
    %c80_i32_0 = arith.constant 80 : i32
    %31 = vector.broadcast %c80_i32_0 : i32 to vector<1x640xi32>
    %32 = arith.muli %30, %31 : vector<1x640xi32>
    %33 = arith.subi %1, %32 : vector<1x640xi32>
    %c1_i32 = arith.constant 1 : i32
    %34 = vector.broadcast %c1_i32 : i32 to vector<1x640xi32>
    %c2_i32 = arith.constant 2 : i32
    %35 = arith.muli %arg0, %c2_i32 : i32
    %c0_i32_1 = arith.constant 0 : i32
    %36 = arith.addi %35, %c0_i32_1 : i32
    %37 = arith.index_cast %36 : i32 to index
    %38 = memref.load %arg2[%37] : memref<4xi32, #tpu.memory_space<smem>>
    %c2_i32_2 = arith.constant 2 : i32
    %39 = arith.muli %arg0, %c2_i32_2 : i32
    %c0_i32_3 = arith.constant 0 : i32
    %40 = arith.addi %39, %c0_i32_3 : i32
    %41 = arith.index_cast %40 : i32 to index
    %42 = memref.load %arg3[%41] : memref<4xi32, #tpu.memory_space<smem>>
    %43 = vector.broadcast %38 : i32 to vector<1x640xi32>
    %44 = arith.cmpi sge, %33, %43 : vector<1x640xi32>
    %45 = arith.addi %38, %42 : i32
    %46 = vector.broadcast %45 : i32 to vector<1x640xi32>
    %47 = arith.cmpi slt, %33, %46 : vector<1x640xi32>
    %48 = arith.andi %44, %47 : vector<1x640xi1>
    %c0_i32_4 = arith.constant 0 : i32
    %49 = vector.broadcast %c0_i32_4 : i32 to vector<1x640xi32>
    %50 = arith.select %48, %49, %34 : vector<1x640xi1>, vector<1x640xi32>
    %c2_i32_5 = arith.constant 2 : i32
    %51 = arith.muli %arg0, %c2_i32_5 : i32
    %c1_i32_6 = arith.constant 1 : i32
    %52 = arith.addi %51, %c1_i32_6 : i32
    %53 = arith.index_cast %52 : i32 to index
    %54 = memref.load %arg2[%53] : memref<4xi32, #tpu.memory_space<smem>>
    %c2_i32_7 = arith.constant 2 : i32
    %55 = arith.muli %arg0, %c2_i32_7 : i32
    %c1_i32_8 = arith.constant 1 : i32
    %56 = arith.addi %55, %c1_i32_8 : i32
    %57 = arith.index_cast %56 : i32 to index
    %58 = memref.load %arg3[%57] : memref<4xi32, #tpu.memory_space<smem>>
    %59 = vector.broadcast %54 : i32 to vector<1x640xi32>
    %60 = arith.cmpi sge, %33, %59 : vector<1x640xi32>
    %61 = arith.addi %54, %58 : i32
    %62 = vector.broadcast %61 : i32 to vector<1x640xi32>
    %63 = arith.cmpi slt, %33, %62 : vector<1x640xi32>
    %64 = arith.andi %60, %63 : vector<1x640xi1>
    %c0_i32_9 = arith.constant 0 : i32
    %65 = vector.broadcast %c0_i32_9 : i32 to vector<1x640xi32>
    %66 = arith.select %64, %65, %50 : vector<1x640xi1>, vector<1x640xi32>
    %67 = tpu.iota {dimensions = array<i32: 0>} : vector<192x8xi32>
    %68 = vector.broadcast %0 : i32 to vector<192x8xi32>
    %69 = arith.addi %67, %68 : vector<192x8xi32>
    %70 = tpu.iota {dimensions = array<i32: 1>} : vector<192x8xi32>
    %c8_i32 = arith.constant 8 : i32
    %71 = vector.broadcast %c8_i32 : i32 to vector<192x8xi32>
    %72 = arith.muli %69, %71 : vector<192x8xi32>
    %73 = arith.addi %72, %70 : vector<192x8xi32>
    %c1_i32_10 = arith.constant 1 : i32
    %74 = vector.broadcast %c1_i32_10 : i32 to vector<192x8xi32>
    %c10_i32 = arith.constant 10 : i32
    %75 = arith.muli %arg0, %c10_i32 : i32
    %c0_i32_11 = arith.constant 0 : i32
    %76 = arith.addi %75, %c0_i32_11 : i32
    %77 = arith.index_cast %76 : i32 to index
    %78 = memref.load %arg4[%77] : memref<20xi32, #tpu.memory_space<smem>>
    %c10_i32_12 = arith.constant 10 : i32
    %79 = arith.muli %arg0, %c10_i32_12 : i32
    %c0_i32_13 = arith.constant 0 : i32
    %80 = arith.addi %79, %c0_i32_13 : i32
    %81 = arith.index_cast %80 : i32 to index
    %82 = memref.load %arg5[%81] : memref<20xi32, #tpu.memory_space<smem>>
    %83 = vector.broadcast %78 : i32 to vector<192x8xi32>
    %84 = arith.cmpi sge, %73, %83 : vector<192x8xi32>
    %85 = arith.addi %78, %82 : i32
    %86 = vector.broadcast %85 : i32 to vector<192x8xi32>
    %87 = arith.cmpi slt, %73, %86 : vector<192x8xi32>
    %88 = arith.andi %84, %87 : vector<192x8xi1>
    %c0_i32_14 = arith.constant 0 : i32
    %89 = vector.broadcast %c0_i32_14 : i32 to vector<192x8xi32>
    %90 = arith.select %88, %89, %74 : vector<192x8xi1>, vector<192x8xi32>
    %c10_i32_15 = arith.constant 10 : i32
    %91 = arith.muli %arg0, %c10_i32_15 : i32
    %c1_i32_16 = arith.constant 1 : i32
    %92 = arith.addi %91, %c1_i32_16 : i32
    %93 = arith.index_cast %92 : i32 to index
    %94 = memref.load %arg4[%93] : memref<20xi32, #tpu.memory_space<smem>>
    %c10_i32_17 = arith.constant 10 : i32
    %95 = arith.muli %arg0, %c10_i32_17 : i32
    %c1_i32_18 = arith.constant 1 : i32
    %96 = arith.addi %95, %c1_i32_18 : i32
    %97 = arith.index_cast %96 : i32 to index
    %98 = memref.load %arg5[%97] : memref<20xi32, #tpu.memory_space<smem>>
    %99 = vector.broadcast %94 : i32 to vector<192x8xi32>
    %100 = arith.cmpi sge, %73, %99 : vector<192x8xi32>
    %101 = arith.addi %94, %98 : i32
    %102 = vector.broadcast %101 : i32 to vector<192x8xi32>
    %103 = arith.cmpi slt, %73, %102 : vector<192x8xi32>
    %104 = arith.andi %100, %103 : vector<192x8xi1>
    %c0_i32_19 = arith.constant 0 : i32
    %105 = vector.broadcast %c0_i32_19 : i32 to vector<192x8xi32>
    %106 = arith.select %104, %105, %90 : vector<192x8xi1>, vector<192x8xi32>
    %c10_i32_20 = arith.constant 10 : i32
    %107 = arith.muli %arg0, %c10_i32_20 : i32
    %c2_i32_21 = arith.constant 2 : i32
    %108 = arith.addi %107, %c2_i32_21 : i32
    %109 = arith.index_cast %108 : i32 to index
    %110 = memref.load %arg4[%109] : memref<20xi32, #tpu.memory_space<smem>>
    %c10_i32_22 = arith.constant 10 : i32
    %111 = arith.muli %arg0, %c10_i32_22 : i32
    %c2_i32_23 = arith.constant 2 : i32
    %112 = arith.addi %111, %c2_i32_23 : i32
    %113 = arith.index_cast %112 : i32 to index
    %114 = memref.load %arg5[%113] : memref<20xi32, #tpu.memory_space<smem>>
    %115 = vector.broadcast %110 : i32 to vector<192x8xi32>
    %116 = arith.cmpi sge, %73, %115 : vector<192x8xi32>
    %117 = arith.addi %110, %114 : i32
    %118 = vector.broadcast %117 : i32 to vector<192x8xi32>
    %119 = arith.cmpi slt, %73, %118 : vector<192x8xi32>
    %120 = arith.andi %116, %119 : vector<192x8xi1>
    %c0_i32_24 = arith.constant 0 : i32
    %121 = vector.broadcast %c0_i32_24 : i32 to vector<192x8xi32>
    %122 = arith.select %120, %121, %106 : vector<192x8xi1>, vector<192x8xi32>
    %c10_i32_25 = arith.constant 10 : i32
    %123 = arith.muli %arg0, %c10_i32_25 : i32
    %c3_i32 = arith.constant 3 : i32
    %124 = arith.addi %123, %c3_i32 : i32
    %125 = arith.index_cast %124 : i32 to index
    %126 = memref.load %arg4[%125] : memref<20xi32, #tpu.memory_space<smem>>
    %c10_i32_26 = arith.constant 10 : i32
    %127 = arith.muli %arg0, %c10_i32_26 : i32
    %c3_i32_27 = arith.constant 3 : i32
    %128 = arith.addi %127, %c3_i32_27 : i32
    %129 = arith.index_cast %128 : i32 to index
    %130 = memref.load %arg5[%129] : memref<20xi32, #tpu.memory_space<smem>>
    %131 = vector.broadcast %126 : i32 to vector<192x8xi32>
    %132 = arith.cmpi sge, %73, %131 : vector<192x8xi32>
    %133 = arith.addi %126, %130 : i32
    %134 = vector.broadcast %133 : i32 to vector<192x8xi32>
    %135 = arith.cmpi slt, %73, %134 : vector<192x8xi32>
    %136 = arith.andi %132, %135 : vector<192x8xi1>
    %c0_i32_28 = arith.constant 0 : i32
    %137 = vector.broadcast %c0_i32_28 : i32 to vector<192x8xi32>
    %138 = arith.select %136, %137, %122 : vector<192x8xi1>, vector<192x8xi32>
    %c10_i32_29 = arith.constant 10 : i32
    %139 = arith.muli %arg0, %c10_i32_29 : i32
    %c4_i32 = arith.constant 4 : i32
    %140 = arith.addi %139, %c4_i32 : i32
    %141 = arith.index_cast %140 : i32 to index
    %142 = memref.load %arg4[%141] : memref<20xi32, #tpu.memory_space<smem>>
    %c10_i32_30 = arith.constant 10 : i32
    %143 = arith.muli %arg0, %c10_i32_30 : i32
    %c4_i32_31 = arith.constant 4 : i32
    %144 = arith.addi %143, %c4_i32_31 : i32
    %145 = arith.index_cast %144 : i32 to index
    %146 = memref.load %arg5[%145] : memref<20xi32, #tpu.memory_space<smem>>
    %147 = vector.broadcast %142 : i32 to vector<192x8xi32>
    %148 = arith.cmpi sge, %73, %147 : vector<192x8xi32>
    %149 = arith.addi %142, %146 : i32
    %150 = vector.broadcast %149 : i32 to vector<192x8xi32>
    %151 = arith.cmpi slt, %73, %150 : vector<192x8xi32>
    %152 = arith.andi %148, %151 : vector<192x8xi1>
    %c0_i32_32 = arith.constant 0 : i32
    %153 = vector.broadcast %c0_i32_32 : i32 to vector<192x8xi32>
    %154 = arith.select %152, %153, %138 : vector<192x8xi1>, vector<192x8xi32>
    %c10_i32_33 = arith.constant 10 : i32
    %155 = arith.muli %arg0, %c10_i32_33 : i32
    %c5_i32 = arith.constant 5 : i32
    %156 = arith.addi %155, %c5_i32 : i32
    %157 = arith.index_cast %156 : i32 to index
    %158 = memref.load %arg4[%157] : memref<20xi32, #tpu.memory_space<smem>>
    %c10_i32_34 = arith.constant 10 : i32
    %159 = arith.muli %arg0, %c10_i32_34 : i32
    %c5_i32_35 = arith.constant 5 : i32
    %160 = arith.addi %159, %c5_i32_35 : i32
    %161 = arith.index_cast %160 : i32 to index
    %162 = memref.load %arg5[%161] : memref<20xi32, #tpu.memory_space<smem>>
    %163 = vector.broadcast %158 : i32 to vector<192x8xi32>
    %164 = arith.cmpi sge, %73, %163 : vector<192x8xi32>
    %165 = arith.addi %158, %162 : i32
    %166 = vector.broadcast %165 : i32 to vector<192x8xi32>
    %167 = arith.cmpi slt, %73, %166 : vector<192x8xi32>
    %168 = arith.andi %164, %167 : vector<192x8xi1>
    %c0_i32_36 = arith.constant 0 : i32
    %169 = vector.broadcast %c0_i32_36 : i32 to vector<192x8xi32>
    %170 = arith.select %168, %169, %154 : vector<192x8xi1>, vector<192x8xi32>
    %c10_i32_37 = arith.constant 10 : i32
    %171 = arith.muli %arg0, %c10_i32_37 : i32
    %c6_i32 = arith.constant 6 : i32
    %172 = arith.addi %171, %c6_i32 : i32
    %173 = arith.index_cast %172 : i32 to index
    %174 = memref.load %arg4[%173] : memref<20xi32, #tpu.memory_space<smem>>
    %c10_i32_38 = arith.constant 10 : i32
    %175 = arith.muli %arg0, %c10_i32_38 : i32
    %c6_i32_39 = arith.constant 6 : i32
    %176 = arith.addi %175, %c6_i32_39 : i32
    %177 = arith.index_cast %176 : i32 to index
    %178 = memref.load %arg5[%177] : memref<20xi32, #tpu.memory_space<smem>>
    %179 = vector.broadcast %174 : i32 to vector<192x8xi32>
    %180 = arith.cmpi sge, %73, %179 : vector<192x8xi32>
    %181 = arith.addi %174, %178 : i32
    %182 = vector.broadcast %181 : i32 to vector<192x8xi32>
    %183 = arith.cmpi slt, %73, %182 : vector<192x8xi32>
    %184 = arith.andi %180, %183 : vector<192x8xi1>
    %c0_i32_40 = arith.constant 0 : i32
    %185 = vector.broadcast %c0_i32_40 : i32 to vector<192x8xi32>
    %186 = arith.select %184, %185, %170 : vector<192x8xi1>, vector<192x8xi32>
    %c10_i32_41 = arith.constant 10 : i32
    %187 = arith.muli %arg0, %c10_i32_41 : i32
    %c7_i32 = arith.constant 7 : i32
    %188 = arith.addi %187, %c7_i32 : i32
    %189 = arith.index_cast %188 : i32 to index
    %190 = memref.load %arg4[%189] : memref<20xi32, #tpu.memory_space<smem>>
    %c10_i32_42 = arith.constant 10 : i32
    %191 = arith.muli %arg0, %c10_i32_42 : i32
    %c7_i32_43 = arith.constant 7 : i32
    %192 = arith.addi %191, %c7_i32_43 : i32
    %193 = arith.index_cast %192 : i32 to index
    %194 = memref.load %arg5[%193] : memref<20xi32, #tpu.memory_space<smem>>
    %195 = vector.broadcast %190 : i32 to vector<192x8xi32>
    %196 = arith.cmpi sge, %73, %195 : vector<192x8xi32>
    %197 = arith.addi %190, %194 : i32
    %198 = vector.broadcast %197 : i32 to vector<192x8xi32>
    %199 = arith.cmpi slt, %73, %198 : vector<192x8xi32>
    %200 = arith.andi %196, %199 : vector<192x8xi1>
    %c0_i32_44 = arith.constant 0 : i32
    %201 = vector.broadcast %c0_i32_44 : i32 to vector<192x8xi32>
    %202 = arith.select %200, %201, %186 : vector<192x8xi1>, vector<192x8xi32>
    %c10_i32_45 = arith.constant 10 : i32
    %203 = arith.muli %arg0, %c10_i32_45 : i32
    %c8_i32_46 = arith.constant 8 : i32
    %204 = arith.addi %203, %c8_i32_46 : i32
    %205 = arith.index_cast %204 : i32 to index
    %206 = memref.load %arg4[%205] : memref<20xi32, #tpu.memory_space<smem>>
    %c10_i32_47 = arith.constant 10 : i32
    %207 = arith.muli %arg0, %c10_i32_47 : i32
    %c8_i32_48 = arith.constant 8 : i32
    %208 = arith.addi %207, %c8_i32_48 : i32
    %209 = arith.index_cast %208 : i32 to index
    %210 = memref.load %arg5[%209] : memref<20xi32, #tpu.memory_space<smem>>
    %211 = vector.broadcast %206 : i32 to vector<192x8xi32>
    %212 = arith.cmpi sge, %73, %211 : vector<192x8xi32>
    %213 = arith.addi %206, %210 : i32
    %214 = vector.broadcast %213 : i32 to vector<192x8xi32>
    %215 = arith.cmpi slt, %73, %214 : vector<192x8xi32>
    %216 = arith.andi %212, %215 : vector<192x8xi1>
    %c0_i32_49 = arith.constant 0 : i32
    %217 = vector.broadcast %c0_i32_49 : i32 to vector<192x8xi32>
    %218 = arith.select %216, %217, %202 : vector<192x8xi1>, vector<192x8xi32>
    %c10_i32_50 = arith.constant 10 : i32
    %219 = arith.muli %arg0, %c10_i32_50 : i32
    %c9_i32 = arith.constant 9 : i32
    %220 = arith.addi %219, %c9_i32 : i32
    %221 = arith.index_cast %220 : i32 to index
    %222 = memref.load %arg4[%221] : memref<20xi32, #tpu.memory_space<smem>>
    %c10_i32_51 = arith.constant 10 : i32
    %223 = arith.muli %arg0, %c10_i32_51 : i32
    %c9_i32_52 = arith.constant 9 : i32
    %224 = arith.addi %223, %c9_i32_52 : i32
    %225 = arith.index_cast %224 : i32 to index
    %226 = memref.load %arg5[%225] : memref<20xi32, #tpu.memory_space<smem>>
    %227 = vector.broadcast %222 : i32 to vector<192x8xi32>
    %228 = arith.cmpi sge, %73, %227 : vector<192x8xi32>
    %229 = arith.addi %222, %226 : i32
    %230 = vector.broadcast %229 : i32 to vector<192x8xi32>
    %231 = arith.cmpi slt, %73, %230 : vector<192x8xi32>
    %232 = arith.andi %228, %231 : vector<192x8xi1>
    %c0_i32_53 = arith.constant 0 : i32
    %233 = vector.broadcast %c0_i32_53 : i32 to vector<192x8xi32>
    %234 = arith.select %232, %233, %218 : vector<192x8xi1>, vector<192x8xi32>
    %235 = arith.shli %234, %70 : vector<192x8xi32>
    %cst = arith.constant dense<0> : vector<192xi32>
    %236 = vector.multi_reduction <add>, %235, %cst [1] : vector<192x8xi32> to vector<192xi32>
    %237 = vector.shape_cast %236 : vector<192xi32> to vector<192x1xi32>
    %c0 = arith.constant 0 : index
    %c0_54 = arith.constant 0 : index
    %c0_55 = arith.constant 0 : index
    %238 = vector.load %arg6[%c0, %c0_54, %c0_55] : memref<1x192x640xf32, #tpu.memory_space<vmem>>, vector<1x192x640xf32>
    %239 = vector.shape_cast %238 : vector<1x192x640xf32> to vector<192x640xf32>
    %240 = vector.broadcast %237 : vector<192x1xi32> to vector<192x640xi32>
    %241 = vector.broadcast %30 : vector<1x640xi32> to vector<192x640xi32>
    %242 = arith.shrsi %240, %241 : vector<192x640xi32>
    %243 = vector.broadcast %66 : vector<1x640xi32> to vector<192x640xi32>
    %244 = arith.andi %242, %243 : vector<192x640xi32>
    %c0_i32_56 = arith.constant 0 : i32
    %245 = vector.broadcast %c0_i32_56 : i32 to vector<192x640xi32>
    %246 = arith.cmpi ne, %244, %245 : vector<192x640xi32>
    %cst_57 = arith.constant 0.000000e+00 : f32
    %247 = vector.broadcast %cst_57 : f32 to vector<192x640xf32>
    %248 = arith.select %246, %239, %247 : vector<192x640xi1>, vector<192x640xf32>
    %c0_58 = arith.constant 0 : index
    %c0_59 = arith.constant 0 : index
    %c0_60 = arith.constant 0 : index
    %249 = vector.load %arg7[%c0_58, %c0_59, %c0_60] : memref<1x192x640xf32, #tpu.memory_space<vmem>>, vector<1x192x640xf32>
    %250 = vector.shape_cast %249 : vector<1x192x640xf32> to vector<192x640xf32>
    %251 = vector.shape_cast %248 : vector<192x640xf32> to vector<1x192x640xf32>
    tpu.vector_store %arg7[%c0_58, %c0_59, %c0_60], %251 {strides = array<i32>} : memref<1x192x640xf32, #tpu.memory_space<vmem>>, vector<1x192x640xf32>,
    return
  }
  func.func @transform_0(%arg0: i32, %arg1: i32, %arg2: memref<4xi32, #tpu.memory_space<smem>>, %arg3: memref<4xi32, #tpu.memory_space<smem>>, %arg4: memref<20xi32, #tpu.memory_space<smem>>, %arg5: memref<20xi32, #tpu.memory_space<smem>>) -> (i32, i32, i32) {
    %c0_i32 = arith.constant 0 : i32
    %c0_i32_0 = arith.constant 0 : i32
    return %arg0, %arg1, %c0_i32 : i32, i32, i32
  }
  func.func @transform_1(%arg0: i32, %arg1: i32, %arg2: memref<4xi32, #tpu.memory_space<smem>>, %arg3: memref<4xi32, #tpu.memory_space<smem>>, %arg4: memref<20xi32, #tpu.memory_space<smem>>, %arg5: memref<20xi32, #tpu.memory_space<smem>>) -> (i32, i32, i32) {
    %c0_i32 = arith.constant 0 : i32
    %c0_i32_0 = arith.constant 0 : i32
    return %arg0, %arg1, %c0_i32 : i32, i32, i32
  }
}

</mosaic_0001>

<llo_original>
// kernel: apply_spec_augment.1
$region0: #{apply_spec_augment.1}
  #allocation0 [shape = 'u32[]', space=smem, size = 0x4, offset = 0x4, fixed_abs, tag = 'smem constant byte address 0x4 - core index']
  #allocation1 [shape = 'u32[144,128]{1,0:T(1,128)}', space=vmem, size = 0x12000, scoped, tag = 'internal scratch']
  #allocation2 [shape = 's32[1]{0}', space=sflag, size = 0x4, scoped, tag = 'scoped memory for apply_spec_augment.1']
  #allocation3 [shape = 'u8[512]{0}', space=smem, size = 0x200, scoped, tag = 'prefetched SMEM operand 0']
  #allocation4 [shape = 'u8[512]{0}', space=smem, size = 0x200, scoped, tag = 'prefetched SMEM operand 1']
  #allocation5 [shape = 'u8[512]{0}', space=smem, size = 0x200, scoped, tag = 'prefetched SMEM operand 2']
  #allocation6 [shape = 'u8[512]{0}', space=smem, size = 0x200, scoped, tag = 'prefetched SMEM operand 3']
  %s0 = inlined_call_operand.vmem [shape: s32[4], index: 0, kind: input, shape index: {}]
  %s1 = inlined_call_operand.vmem [shape: s32[4], index: 1, kind: input, shape index: {}]
  %s2 = inlined_call_operand.vmem [shape: s32[20], index: 2, kind: input, shape index: {}]
  %s3 = inlined_call_operand.vmem [shape: s32[20], index: 3, kind: input, shape index: {}]
  %s4 = inlined_call_operand.vmem [shape: f32[2,192,640], index: 4, kind: input, shape index: {}, may-alias: {4,5}]
  %s5 = inlined_call_operand.vmem [shape: f32[2,192,640], index: 5, kind: output, shape index: {}, may-alias: {4,5}]
  %s6 = sld [smem:[#allocation0]]
  $region37: #{apply_spec_augment.1} parent=0
    _
  %s8 = ssub.s32 1, %s6
  %s9 = scalar_select 0, %s8, %s6
  %s10 = sshll.u32 %s0, 4
  %s11 = int_to_ptr.vmem [resolvable:$true] %s10
  %13 = dma.vmem_to_smem %s11, 16, [#allocation3], [#allocation2]
  %s14 = sshll.u32 %s1, 4
  %s15 = int_to_ptr.vmem [resolvable:$true] %s14
  %17 = dma.vmem_to_smem %s15, 16, [#allocation4], [#allocation2]
  %s18 = sshll.u32 %s2, 4
  %s19 = int_to_ptr.vmem [resolvable:$true] %s18
  %21 = dma.vmem_to_smem %s19, 16, [#allocation5], [#allocation2]
  %s22 = sshll.u32 %s3, 4
  %s23 = int_to_ptr.vmem [resolvable:$true] %s22
  %25 = dma.vmem_to_smem %s23, 16, [#allocation6], [#allocation2]
  %26 = dma.done [#allocation2], 64
  %27 = sfence
  loop: start=0, step=1, limit=4
  $region2: #{apply_spec_augment.1} parent=0 // loop_pre_header
    _
  $region3: #{apply_spec_augment.1} parent=0 // loop_header
    %s29 = sphi 0, %s33
    %p30 = scmp.ge.s32.totalorder %s29, 4
    %s36 = sphi 0, %s48
    %s37 = sphi 0, %s44
    %s38 = sphi 0, %s36
    %s39 = sphi 0, %s37
    %s40 = sphi 0, %s38
    %s41 = sphi 0, %s39
    %s53 = sphi 0, %s55
    %s56 = sphi 0, %s53
    %s57 = sphi 0, %s56
    %s73 = sphi 0, %s57
    %s81 = sphi 0, %s83
    %s84 = sphi 0, %s81
    %s85 = sphi 0, %s84
    %s101 = sphi 0, %s85
  $region4: #{apply_spec_augment.1} parent=0 // loop_header_branch
    %32 = sbr.rel (%p30) target = $region8
  $region5: #{apply_spec_augment.1} parent=0 // loop_body
    %s34 = ssub.s32 %s29, 1
    %s35 = ssub.s32 %s29, 2
    %s42 = sadd.s32 1, %s37
    %p43 = scmp.ge.s32.totalorder %s42, 1
    %s44 = scalar_select %p43, 0, %s42
    %s45 = sadd.s32 1, %s36
    %s46 = scalar_select %p43, %s45, %s36
    %p47 = scmp.ge.s32.totalorder %s46, 2
    %s48 = scalar_select %p47, 0, %s46
    %s49 = ssub.s32 %s36, %s48
    %s50 = ssub.s32 %s37, %s44
    %s51 = sor.u32 %s49, %s50
    %p52 = scmp.eq.s32.totalorder %s51, 0
    %s54 = sadd.s32 %s53, 1
    %s55 = scalar_select %p52, %s53, %s54
    %p58 = pneg %p52
    %p59 = scmp.eq.s32.totalorder %s29, 1
    %p60 = por %p58, %p59
    %p61 = scmp.ne.s32.totalorder %s53, %s56
    %p62 = scmp.eq.s32.totalorder %s29, 0
    %p63 = por %p61, %p62
    %p64 = scmp.ne.s32.totalorder %s53, %s56
    %p65 = scmp.eq.s32.totalorder %s34, 1
    %p66 = por %p64, %p65
    %p67 = scmp.ne.s32.totalorder %s56, %s57
    %p68 = scmp.eq.s32.totalorder %s34, 0
    %p69 = por %p67, %p68
    %p70 = scmp.ne.s32.totalorder %s56, %s57
    %p71 = scmp.eq.s32.totalorder %s35, 1
    %p72 = por %p70, %p71
    %p74 = scmp.ne.s32.totalorder %s57, %s73
    %p75 = scmp.eq.s32.totalorder %s35, 0
    %p76 = por %p74, %p75
    %s77 = ssub.s32 %s36, %s48
    %s78 = ssub.s32 %s37, %s44
    %s79 = sor.u32 %s77, %s78
    %p80 = scmp.eq.s32.totalorder %s79, 0
    %s82 = sadd.s32 %s81, 1
    %s83 = scalar_select %p80, %s81, %s82
    %p86 = pneg %p80
    %p87 = scmp.eq.s32.totalorder %s29, 1
    %p88 = por %p86, %p87
    %p89 = scmp.ne.s32.totalorder %s81, %s84
    %p90 = scmp.eq.s32.totalorder %s29, 0
    %p91 = por %p89, %p90
    %p92 = scmp.ne.s32.totalorder %s81, %s84
    %p93 = scmp.eq.s32.totalorder %s34, 1
    %p94 = por %p92, %p93
    %p95 = scmp.ne.s32.totalorder %s84, %s85
    %p96 = scmp.eq.s32.totalorder %s34, 0
    %p97 = por %p95, %p96
    %p98 = scmp.ne.s32.totalorder %s84, %s85
    %p99 = scmp.eq.s32.totalorder %s35, 1
    %p100 = por %p98, %p99
    %p102 = scmp.ne.s32.totalorder %s85, %s101
    %p103 = scmp.eq.s32.totalorder %s35, 0
    %p104 = por %p102, %p103
    %p105 = scmp.le.s32.totalorder 1, %s29
    %p106 = scmp.lt.s32.totalorder %s29, 3
    %p107 = pnand %p105, %p106
    %p108 = pneg %p107
    // Predicated region
    $region9: #{apply_spec_augment.1} parent=5 // pred_check
      _
    $region10: #{apply_spec_augment.1} parent=5 // pred_check_branch
      %110 = sbr.rel (%p107) target = $region12
    $region11: #{apply_spec_augment.1} parent=5 // pred_region
      %s111 = ssub.s32 %s29, 1
    $region12: #{apply_spec_augment.1} parent=5 // pred_fallthru
      _
    %p112 = scmp.lt.s32.totalorder %s29, 2
    // Predicated region
    $region13: #{apply_spec_augment.1} parent=5 // pred_check
      %p113 = pneg %p112
    $region14: #{apply_spec_augment.1} parent=5 // pred_check_branch
      %115 = sbr.rel (%p113) target = $region16
    $region15: #{apply_spec_augment.1} parent=5 // pred_region
      // Predicated region
      $region17: #{apply_spec_augment.1} parent=15 // pred_check
        %p116 = pneg %p63
      $region18: #{apply_spec_augment.1} parent=15 // pred_check_branch
        %118 = sbr.rel (%p116) target = $region20
      $region19: #{apply_spec_augment.1} parent=15 // pred_region
        %s119 = smul.u32 24, %s37
        %p120 = scmp.lt.s32.totalorder %s36, 1
        %s121 = scalar_select %p120, %s36, 1
        %p122 = scmp.lt.s32.totalorder %s119, 23
        %s123 = scalar_select %p122, %s119, 23
        %s124 = smul.addr %s123, 5
        %s125 = smul.addr %s121, 120
        %s126 = sadd.s32 %s124, %s125
        %s127 = smul.addr %s126, 8
        %s128 = scalar_lea.vmem %s4, %s127
        %s129 = smul.u32 24, %s37
      $region20: #{apply_spec_augment.1} parent=15 // pred_fallthru
        _
    $region16: #{apply_spec_augment.1} parent=5 // pred_fallthru
      _
    %p130 = scmp.le.s32.totalorder 1, %s29
    %p131 = scmp.lt.s32.totalorder %s29, 3
    %p132 = pnand %p130, %p131
    %p133 = pneg %p132
    // Predicated region
    $region21: #{apply_spec_augment.1} parent=5 // pred_check
      _
    $region22: #{apply_spec_augment.1} parent=5 // pred_check_branch
      %135 = sbr.rel (%p132) target = $region24
    $region23: #{apply_spec_augment.1} parent=5 // pred_region
      %s136 = ssub.s32 %s29, 1
      %s137 = smul.u32 24, %s39
      %p138 = scmp.lt.s32.totalorder %s38, 1
      %s139 = scalar_select %p138, %s38, 1
      %p140 = scmp.lt.s32.totalorder %s137, 23
      %s141 = scalar_select %p140, %s137, 23
      %s142 = smul.addr %s141, 5
      %s143 = smul.addr %s139, 120
      %s144 = sadd.s32 %s142, %s143
      %s145 = smul.addr %s144, 8
      %s146 = scalar_lea.vmem %s4, %s145
      %p147 = pneg %p69
      %p148 = pneg %p66
      %p149 = pneg %p97
      %p150 = pneg %p94
      %s151 = smul.u32 24, %s39
      %p152 = scmp.lt.s32.totalorder %s38, 1
      %s153 = scalar_select %p152, %s38, 1
      %p154 = scmp.lt.s32.totalorder %s151, 23
      %s155 = scalar_select %p154, %s151, 23
      %s156 = smul.addr %s155, 5
      %s157 = smul.addr %s153, 120
      %s158 = sadd.s32 %s156, %s157
      %s159 = smul.addr %s158, 8
      %s160 = scalar_lea.vmem %s5, %s159
      %s161 = smul.u32 24, %s39
      %p162 = scmp.lt.s32.totalorder %s38, 1
      %s163 = scalar_select %p162, %s38, 1
      %p164 = scmp.lt.s32.totalorder %s161, 23
      %s165 = scalar_select %p164, %s161, 23
      %s166 = smul.addr %s165, 5
      %s167 = smul.addr %s163, 120
      %s168 = sadd.s32 %s166, %s167
      %s169 = smul.addr %s168, 8
      %s170 = scalar_lea.vmem %s4, %s169
      %s171 = smul.u32 24, %s39
      %s172 = smul.u32 24, %s39
      %p173 = scmp.lt.s32.totalorder %s38, 1
      %s174 = scalar_select %p173, %s38, 1
      %p175 = scmp.lt.s32.totalorder %s172, 23
      %s176 = scalar_select %p175, %s172, 23
      %s177 = smul.addr %s176, 5
      %s178 = smul.addr %s174, 120
      %s179 = sadd.s32 %s177, %s178
      %s180 = smul.addr %s179, 8
      %s181 = scalar_lea.vmem %s5, %s180
      %s182 = smul.u32 24, %s39
      %s183 = smul.u32 %s39, 192
      %v184 = vlaneseq
      %v185 = vand.u32 %v184, 127
      %v186 = vadd.s32 %v185, 128
      %v187 = vadd.s32 %v185, 256
      %v188 = vadd.s32 %v185, 384
      %v189 = vadd.s32 %v185, 512
      %vm190 = vcmp.ge.s32.totalorder %v185, 80
      %vm191 = vcmp.ge.s32.totalorder %v186, 80
      %vm192 = vcmp.ge.s32.totalorder %v187, 80
      %vm193 = vcmp.ge.s32.totalorder %v188, 80
      %vm194 = vcmp.ge.s32.totalorder %v189, 80
      %v195 = vsel %vm190, 1, 0
      %v196 = vsel %vm191, 1, 0
      %v197 = vsel %vm192, 1, 0
      %v198 = vsel %vm193, 1, 0
      %v199 = vsel %vm194, 1, 0
      %vm200 = vcmp.ge.s32.totalorder %v185, 160
      %vm201 = vcmp.ge.s32.totalorder %v186, 160
      %vm202 = vcmp.ge.s32.totalorder %v187, 160
      %vm203 = vcmp.ge.s32.totalorder %v188, 160
      %vm204 = vcmp.ge.s32.totalorder %v189, 160
      %v205 = vsel %vm200, 1, 0
      %v206 = vsel %vm201, 1, 0
      %v207 = vsel %vm202, 1, 0
      %v208 = vsel %vm203, 1, 0
      %v209 = vsel %vm204, 1, 0
      %v210 = vadd.s32 %v195, %v205
      %v211 = vadd.s32 %v196, %v206
      %v212 = vadd.s32 %v197, %v207
      %v213 = vadd.s32 %v198, %v208
      %v214 = vadd.s32 %v199, %v209
      %vm215 = vcmp.ge.s32.totalorder %v185, 240
      %vm216 = vcmp.ge.s32.totalorder %v186, 240
      %vm217 = vcmp.ge.s32.totalorder %v187, 240
      %vm218 = vcmp.ge.s32.totalorder %v188, 240
      %vm219 = vcmp.ge.s32.totalorder %v189, 240
      %v220 = vsel %vm215, 1, 0
      %v221 = vsel %vm216, 1, 0
      %v222 = vsel %vm217, 1, 0
      %v223 = vsel %vm218, 1, 0
      %v224 = vsel %vm219, 1, 0
      %v225 = vadd.s32 %v210, %v220
      %v226 = vadd.s32 %v211, %v221
      %v227 = vadd.s32 %v212, %v222
      %v228 = vadd.s32 %v213, %v223
      %v229 = vadd.s32 %v214, %v224
      %vm230 = vcmp.ge.s32.totalorder %v185, 320
      %vm231 = vcmp.ge.s32.totalorder %v186, 320
      %vm232 = vcmp.ge.s32.totalorder %v187, 320
      %vm233 = vcmp.ge.s32.totalorder %v188, 320
      %vm234 = vcmp.ge.s32.totalorder %v189, 320
      %v235 = vsel %vm230, 1, 0
      %v236 = vsel %vm231, 1, 0
      %v237 = vsel %vm232, 1, 0
      %v238 = vsel %vm233, 1, 0
      %v239 = vsel %vm234, 1, 0
      %v240 = vadd.s32 %v225, %v235
      %v241 = vadd.s32 %v226, %v236
      %v242 = vadd.s32 %v227, %v237
      %v243 = vadd.s32 %v228, %v238
      %v244 = vadd.s32 %v229, %v239
      %vm245 = vcmp.ge.s32.totalorder %v185, 400
      %vm246 = vcmp.ge.s32.totalorder %v186, 400
      %vm247 = vcmp.ge.s32.totalorder %v187, 400
      %vm248 = vcmp.ge.s32.totalorder %v188, 400
      %vm249 = vcmp.ge.s32.totalorder %v189, 400
      %v250 = vsel %vm245, 1, 0
      %v251 = vsel %vm246, 1, 0
      %v252 = vsel %vm247, 1, 0
      %v253 = vsel %vm248, 1, 0
      %v254 = vsel %vm249, 1, 0
      %v255 = vadd.s32 %v240, %v250
      %v256 = vadd.s32 %v241, %v251
      %v257 = vadd.s32 %v242, %v252
      %v258 = vadd.s32 %v243, %v253
      %v259 = vadd.s32 %v244, %v254
      %vm260 = vcmp.ge.s32.totalorder %v185, 480
      %vm261 = vcmp.ge.s32.totalorder %v186, 480
      %vm262 = vcmp.ge.s32.totalorder %v187, 480
      %vm263 = vcmp.ge.s32.totalorder %v188, 480
      %vm264 = vcmp.ge.s32.totalorder %v189, 480
      %v265 = vsel %vm260, 1, 0
      %v266 = vsel %vm261, 1, 0
      %v267 = vsel %vm262, 1, 0
      %v268 = vsel %vm263, 1, 0
      %v269 = vsel %vm264, 1, 0
      %v270 = vadd.s32 %v255, %v265
      %v271 = vadd.s32 %v256, %v266
      %v272 = vadd.s32 %v257, %v267
      %v273 = vadd.s32 %v258, %v268
      %v274 = vadd.s32 %v259, %v269
      %vm275 = vcmp.ge.s32.totalorder %v185, 560
      %vm276 = vcmp.ge.s32.totalorder %v186, 560
      %vm277 = vcmp.ge.s32.totalorder %v187, 560
      %vm278 = vcmp.ge.s32.totalorder %v188, 560
      %vm279 = vcmp.ge.s32.totalorder %v189, 560
      %v280 = vsel %vm275, 1, 0
      %v281 = vsel %vm276, 1, 0
      %v282 = vsel %vm277, 1, 0
      %v283 = vsel %vm278, 1, 0
      %v284 = vsel %vm279, 1, 0
      %v285 = vadd.s32 %v270, %v280
      %v286 = vadd.s32 %v271, %v281
      %v287 = vadd.s32 %v272, %v282
      %v288 = vadd.s32 %v273, %v283
      %v289 = vadd.s32 %v274, %v284
      %v290 = vmul.u32 %v285, 80
      %v291 = vmul.u32 %v286, 80
      %v292 = vmul.u32 %v287, 80
      %v293 = vmul.u32 %v288, 80
      %v294 = vmul.u32 %v289, 80
      %v295 = vsub.s32 %v185, %v290
      %v296 = vsub.s32 %v186, %v291
      %v297 = vsub.s32 %v187, %v292
      %v298 = vsub.s32 %v188, %v293
      %v299 = vsub.s32 %v189, %v294
      %s300 = smul.u32 %s38, 2
      %s301 = sld [smem:[#allocation3 + %s300]]
      %s302 = sld [smem:[#allocation4 + %s300]]
      %v303 = vstv %s301
      %vm304 = vcmp.ge.s32.totalorder %v295, %v303
      %vm305 = vcmp.ge.s32.totalorder %v296, %v303
      %vm306 = vcmp.ge.s32.totalorder %v297, %v303
      %vm307 = vcmp.ge.s32.totalorder %v298, %v303
      %vm308 = vcmp.ge.s32.totalorder %v299, %v303
      %s309 = sadd.s32 %s301, %s302
      %v310 = vstv %s309
      %vm311 = vcmp.lt.s32.totalorder %v295, %v310
      %vm312 = vcmp.lt.s32.totalorder %v296, %v310
      %vm313 = vcmp.lt.s32.totalorder %v297, %v310
      %vm314 = vcmp.lt.s32.totalorder %v298, %v310
      %vm315 = vcmp.lt.s32.totalorder %v299, %v310
      %vm316 = vmand %vm304, %vm311
      %vm317 = vmand %vm305, %vm312
      %vm318 = vmand %vm306, %vm313
      %vm319 = vmand %vm307, %vm314
      %vm320 = vmand %vm308, %vm315
      %v321 = vsel %vm316, 0, 1
      %v322 = vsel %vm317, 0, 1
      %v323 = vsel %vm318, 0, 1
      %v324 = vsel %vm319, 0, 1
      %v325 = vsel %vm320, 0, 1
      %s326 = sadd.s32 %s300, 1
      %s327 = sld [smem:[#allocation3 + %s326]]
      %s328 = sld [smem:[#allocation4 + %s326]]
      %v329 = vstv %s327
      %vm330 = vcmp.ge.s32.totalorder %v295, %v329
      %vm331 = vcmp.ge.s32.totalorder %v296, %v329
      %vm332 = vcmp.ge.s32.totalorder %v297, %v329
      %vm333 = vcmp.ge.s32.totalorder %v298, %v329
      %vm334 = vcmp.ge.s32.totalorder %v299, %v329
      %s335 = sadd.s32 %s327, %s328
      %v336 = vstv %s335
      %vm337 = vcmp.lt.s32.totalorder %v295, %v336
      %vm338 = vcmp.lt.s32.totalorder %v296, %v336
      %vm339 = vcmp.lt.s32.totalorder %v297, %v336
      %vm340 = vcmp.lt.s32.totalorder %v298, %v336
      %vm341 = vcmp.lt.s32.totalorder %v299, %v336
      %vm342 = vmand %vm330, %vm337
      %vm343 = vmand %vm331, %vm338
      %vm344 = vmand %vm332, %vm339
      %vm345 = vmand %vm333, %vm340
      %vm346 = vmand %vm334, %vm341
      %v347 = vsel %vm342, 0, %v321
      %v348 = vsel %vm343, 0, %v322
      %v349 = vsel %vm344, 0, %v323
      %v350 = vsel %vm345, 0, %v324
      %v351 = vsel %vm346, 0, %v325
      %v352 = vlaneseq
      %v353 = vshrl.u32 %v352, 7
      %v354 = vadd.s32 %v353, 8
      %v355 = vadd.s32 %v353, 16
      %v356 = vadd.s32 %v353, 24
      %v357 = vadd.s32 %v353, 32
      %v358 = vadd.s32 %v353, 40
      %v359 = vadd.s32 %v353, 48
      %v360 = vadd.s32 %v353, 56
      %v361 = vadd.s32 %v353, 64
      %v362 = vadd.s32 %v353, 72
      %v363 = vadd.s32 %v353, 80
      %v364 = vadd.s32 %v353, 88
      %v365 = vadd.s32 %v353, 96
      %v366 = vadd.s32 %v353, 104
      %v367 = vadd.s32 %v353, 112
      %v368 = vadd.s32 %v353, 120
      %v369 = vadd.s32 %v353, 128
      %v370 = vadd.s32 %v353, 136
      %v371 = vadd.s32 %v353, 144
      %v372 = vadd.s32 %v353, 152
      %v373 = vadd.s32 %v353, 160
      %v374 = vadd.s32 %v353, 168
      %v375 = vadd.s32 %v353, 176
      %v376 = vadd.s32 %v353, 184
      %v377 = vstv %s183
      %v378 = vadd.s32 %v353, %v377
      %v379 = vadd.s32 %v354, %v377
      %v380 = vadd.s32 %v355, %v377
      %v381 = vadd.s32 %v356, %v377
      %v382 = vadd.s32 %v357, %v377
      %v383 = vadd.s32 %v358, %v377
      %v384 = vadd.s32 %v359, %v377
      %v385 = vadd.s32 %v360, %v377
      %v386 = vadd.s32 %v361, %v377
      %v387 = vadd.s32 %v362, %v377
      %v388 = vadd.s32 %v363, %v377
      %v389 = vadd.s32 %v364, %v377
      %v390 = vadd.s32 %v365, %v377
      %v391 = vadd.s32 %v366, %v377
      %v392 = vadd.s32 %v367, %v377
      %v393 = vadd.s32 %v368, %v377
      %v394 = vadd.s32 %v369, %v377
      %v395 = vadd.s32 %v370, %v377
      %v396 = vadd.s32 %v371, %v377
      %v397 = vadd.s32 %v372, %v377
      %v398 = vadd.s32 %v373, %v377
      %v399 = vadd.s32 %v374, %v377
      %v400 = vadd.s32 %v375, %v377
      %v401 = vadd.s32 %v376, %v377
      %v402 = vmul.u32 %v378, 8
      %v403 = vmul.u32 %v379, 8
      %v404 = vmul.u32 %v380, 8
      %v405 = vmul.u32 %v381, 8
      %v406 = vmul.u32 %v382, 8
      %v407 = vmul.u32 %v383, 8
      %v408 = vmul.u32 %v384, 8
      %v409 = vmul.u32 %v385, 8
      %v410 = vmul.u32 %v386, 8
      %v411 = vmul.u32 %v387, 8
      %v412 = vmul.u32 %v388, 8
      %v413 = vmul.u32 %v389, 8
      %v414 = vmul.u32 %v390, 8
      %v415 = vmul.u32 %v391, 8
      %v416 = vmul.u32 %v392, 8
      %v417 = vmul.u32 %v393, 8
      %v418 = vmul.u32 %v394, 8
      %v419 = vmul.u32 %v395, 8
      %v420 = vmul.u32 %v396, 8
      %v421 = vmul.u32 %v397, 8
      %v422 = vmul.u32 %v398, 8
      %v423 = vmul.u32 %v399, 8
      %v424 = vmul.u32 %v400, 8
      %v425 = vmul.u32 %v401, 8
      %v426 = vadd.s32 %v402, %v185
      %v427 = vadd.s32 %v403, %v185
      %v428 = vadd.s32 %v404, %v185
      %v429 = vadd.s32 %v405, %v185
      %v430 = vadd.s32 %v406, %v185
      %v431 = vadd.s32 %v407, %v185
      %v432 = vadd.s32 %v408, %v185
      %v433 = vadd.s32 %v409, %v185
      %v434 = vadd.s32 %v410, %v185
      %v435 = vadd.s32 %v411, %v185
      %v436 = vadd.s32 %v412, %v185
      %v437 = vadd.s32 %v413, %v185
      %v438 = vadd.s32 %v414, %v185
      %v439 = vadd.s32 %v415, %v185
      %v440 = vadd.s32 %v416, %v185
      %v441 = vadd.s32 %v417, %v185
      %v442 = vadd.s32 %v418, %v185
      %v443 = vadd.s32 %v419, %v185
      %v444 = vadd.s32 %v420, %v185
      %v445 = vadd.s32 %v421, %v185
      %v446 = vadd.s32 %v422, %v185
      %v447 = vadd.s32 %v423, %v185
      %v448 = vadd.s32 %v424, %v185
      %v449 = vadd.s32 %v425, %v185
      %s450 = smul.u32 %s38, 10
      %s451 = sld [smem:[#allocation5 + %s450]]
      %s452 = sld [smem:[#allocation6 + %s450]]
      %v453 = vstv %s451
      %vm454 = vcmp.ge.s32.totalorder %v426, %v453
      %vm455 = vcmp.ge.s32.totalorder %v427, %v453
      %vm456 = vcmp.ge.s32.totalorder %v428, %v453
      %vm457 = vcmp.ge.s32.totalorder %v429, %v453
      %vm458 = vcmp.ge.s32.totalorder %v430, %v453
      %vm459 = vcmp.ge.s32.totalorder %v431, %v453
      %vm460 = vcmp.ge.s32.totalorder %v432, %v453
      %vm461 = vcmp.ge.s32.totalorder %v433, %v453
      %vm462 = vcmp.ge.s32.totalorder %v434, %v453
      %vm463 = vcmp.ge.s32.totalorder %v435, %v453
      %vm464 = vcmp.ge.s32.totalorder %v436, %v453
      %vm465 = vcmp.ge.s32.totalorder %v437, %v453
      %vm466 = vcmp.ge.s32.totalorder %v438, %v453
      %vm467 = vcmp.ge.s32.totalorder %v439, %v453
      %vm468 = vcmp.ge.s32.totalorder %v440, %v453
      %vm469 = vcmp.ge.s32.totalorder %v441, %v453
      %vm470 = vcmp.ge.s32.totalorder %v442, %v453
      %vm471 = vcmp.ge.s32.totalorder %v443, %v453
      %vm472 = vcmp.ge.s32.totalorder %v444, %v453
      %vm473 = vcmp.ge.s32.totalorder %v445, %v453
      %vm474 = vcmp.ge.s32.totalorder %v446, %v453
      %vm475 = vcmp.ge.s32.totalorder %v447, %v453
      %vm476 = vcmp.ge.s32.totalorder %v448, %v453
      %vm477 = vcmp.ge.s32.totalorder %v449, %v453
      %s478 = sadd.s32 %s451, %s452
      %v479 = vstv %s478
      %vm480 = vcmp.lt.s32.totalorder %v426, %v479
      %vm481 = vcmp.lt.s32.totalorder %v427, %v479
      %vm482 = vcmp.lt.s32.totalorder %v428, %v479
      %vm483 = vcmp.lt.s32.totalorder %v429, %v479
      %vm484 = vcmp.lt.s32.totalorder %v430, %v479
      %vm485 = vcmp.lt.s32.totalorder %v431, %v479
      %vm486 = vcmp.lt.s32.totalorder %v432, %v479
      %vm487 = vcmp.lt.s32.totalorder %v433, %v479
      %vm488 = vcmp.lt.s32.totalorder %v434, %v479
      %vm489 = vcmp.lt.s32.totalorder %v435, %v479
      %vm490 = vcmp.lt.s32.totalorder %v436, %v479
      %vm491 = vcmp.lt.s32.totalorder %v437, %v479
      %vm492 = vcmp.lt.s32.totalorder %v438, %v479
      %vm493 = vcmp.lt.s32.totalorder %v439, %v479
      %vm494 = vcmp.lt.s32.totalorder %v440, %v479
      %vm495 = vcmp.lt.s32.totalorder %v441, %v479
      %vm496 = vcmp.lt.s32.totalorder %v442, %v479
      %vm497 = vcmp.lt.s32.totalorder %v443, %v479
      %vm498 = vcmp.lt.s32.totalorder %v444, %v479
      %vm499 = vcmp.lt.s32.totalorder %v445, %v479
      %vm500 = vcmp.lt.s32.totalorder %v446, %v479
      %vm501 = vcmp.lt.s32.totalorder %v447, %v479
      %vm502 = vcmp.lt.s32.totalorder %v448, %v479
      %vm503 = vcmp.lt.s32.totalorder %v449, %v479
      %vm504 = vmand %vm454, %vm480
      %vm505 = vmand %vm455, %vm481
      %vm506 = vmand %vm456, %vm482
      %vm507 = vmand %vm457, %vm483
      %vm508 = vmand %vm458, %vm484
      %vm509 = vmand %vm459, %vm485
      %vm510 = vmand %vm460, %vm486
      %vm511 = vmand %vm461, %vm487
      %vm512 = vmand %vm462, %vm488
      %vm513 = vmand %vm463, %vm489
      %vm514 = vmand %vm464, %vm490
      %vm515 = vmand %vm465, %vm491
      %vm516 = vmand %vm466, %vm492
      %vm517 = vmand %vm467, %vm493
      %vm518 = vmand %vm468, %vm494
      %vm519 = vmand %vm469, %vm495
      %vm520 = vmand %vm470, %vm496
      %vm521 = vmand %vm471, %vm497
      %vm522 = vmand %vm472, %vm498
      %vm523 = vmand %vm473, %vm499
      %vm524 = vmand %vm474, %vm500
      %vm525 = vmand %vm475, %vm501
      %vm526 = vmand %vm476, %vm502
      %vm527 = vmand %vm477, %vm503
      %v528 = vsel %vm504, 0, 1
      %v529 = vsel %vm505, 0, 1
      %v530 = vsel %vm506, 0, 1
      %v531 = vsel %vm507, 0, 1
      %v532 = vsel %vm508, 0, 1
      %v533 = vsel %vm509, 0, 1
      %v534 = vsel %vm510, 0, 1
      %v535 = vsel %vm511, 0, 1
      %v536 = vsel %vm512, 0, 1
      %v537 = vsel %vm513, 0, 1
      %v538 = vsel %vm514, 0, 1
      %v539 = vsel %vm515, 0, 1
      %v540 = vsel %vm516, 0, 1
      %v541 = vsel %vm517, 0, 1
      %v542 = vsel %vm518, 0, 1
      %v543 = vsel %vm519, 0, 1
      %v544 = vsel %vm520, 0, 1
      %v545 = vsel %vm521, 0, 1
      %v546 = vsel %vm522, 0, 1
      %v547 = vsel %vm523, 0, 1
      %v548 = vsel %vm524, 0, 1
      %v549 = vsel %vm525, 0, 1
      %v550 = vsel %vm526, 0, 1
      %v551 = vsel %vm527, 0, 1
      %s552 = sadd.s32 %s450, 1
      %s553 = sld [smem:[#allocation5 + %s552]]
      %s554 = sld [smem:[#allocation6 + %s552]]
      %v555 = vstv %s553
      %vm556 = vcmp.ge.s32.totalorder %v426, %v555
      %vm557 = vcmp.ge.s32.totalorder %v427, %v555
      %vm558 = vcmp.ge.s32.totalorder %v428, %v555
      %vm559 = vcmp.ge.s32.totalorder %v429, %v555
      %vm560 = vcmp.ge.s32.totalorder %v430, %v555
      %vm561 = vcmp.ge.s32.totalorder %v431, %v555
      %vm562 = vcmp.ge.s32.totalorder %v432, %v555
      %vm563 = vcmp.ge.s32.totalorder %v433, %v555
      %vm564 = vcmp.ge.s32.totalorder %v434, %v555
      %vm565 = vcmp.ge.s32.totalorder %v435, %v555
      %vm566 = vcmp.ge.s32.totalorder %v436, %v555
      %vm567 = vcmp.ge.s32.totalorder %v437, %v555
      %vm568 = vcmp.ge.s32.totalorder %v438, %v555
      %vm569 = vcmp.ge.s32.totalorder %v439, %v555
      %vm570 = vcmp.ge.s32.totalorder %v440, %v555
      %vm571 = vcmp.ge.s32.totalorder %v441, %v555
      %vm572 = vcmp.ge.s32.totalorder %v442, %v555
      %vm573 = vcmp.ge.s32.totalorder %v443, %v555
      %vm574 = vcmp.ge.s32.totalorder %v444, %v555
      %vm575 = vcmp.ge.s32.totalorder %v445, %v555
      %vm576 = vcmp.ge.s32.totalorder %v446, %v555
      %vm577 = vcmp.ge.s32.totalorder %v447, %v555
      %vm578 = vcmp.ge.s32.totalorder %v448, %v555
      %vm579 = vcmp.ge.s32.totalorder %v449, %v555
      %s580 = sadd.s32 %s553, %s554
      %v581 = vstv %s580
      %vm582 = vcmp.lt.s32.totalorder %v426, %v581
      %vm583 = vcmp.lt.s32.totalorder %v427, %v581
      %vm584 = vcmp.lt.s32.totalorder %v428, %v581
      %vm585 = vcmp.lt.s32.totalorder %v429, %v581
      %vm586 = vcmp.lt.s32.totalorder %v430, %v581
      %vm587 = vcmp.lt.s32.totalorder %v431, %v581
      %vm588 = vcmp.lt.s32.totalorder %v432, %v581
      %vm589 = vcmp.lt.s32.totalorder %v433, %v581
      %vm590 = vcmp.lt.s32.totalorder %v434, %v581
      %vm591 = vcmp.lt.s32.totalorder %v435, %v581
      %vm592 = vcmp.lt.s32.totalorder %v436, %v581
      %vm593 = vcmp.lt.s32.totalorder %v437, %v581
      %vm594 = vcmp.lt.s32.totalorder %v438, %v581
      %vm595 = vcmp.lt.s32.totalorder %v439, %v581
      %vm596 = vcmp.lt.s32.totalorder %v440, %v581
      %vm597 = vcmp.lt.s32.totalorder %v441, %v581
      %vm598 = vcmp.lt.s32.totalorder %v442, %v581
      %vm599 = vcmp.lt.s32.totalorder %v443, %v581
      %vm600 = vcmp.lt.s32.totalorder %v444, %v581
      %vm601 = vcmp.lt.s32.totalorder %v445, %v581
      %vm602 = vcmp.lt.s32.totalorder %v446, %v581
      %vm603 = vcmp.lt.s32.totalorder %v447, %v581
      %vm604 = vcmp.lt.s32.totalorder %v448, %v581
      %vm605 = vcmp.lt.s32.totalorder %v449, %v581
      %vm606 = vmand %vm556, %vm582
      %vm607 = vmand %vm557, %vm583
      %vm608 = vmand %vm558, %vm584
      %vm609 = vmand %vm559, %vm585
      %vm610 = vmand %vm560, %vm586
      %vm611 = vmand %vm561, %vm587
      %vm612 = vmand %vm562, %vm588
      %vm613 = vmand %vm563, %vm589
      %vm614 = vmand %vm564, %vm590
      %vm615 = vmand %vm565, %vm591
      %vm616 = vmand %vm566, %vm592
      %vm617 = vmand %vm567, %vm593
      %vm618 = vmand %vm568, %vm594
      %vm619 = vmand %vm569, %vm595
      %vm620 = vmand %vm570, %vm596
      %vm621 = vmand %vm571, %vm597
      %vm622 = vmand %vm572, %vm598
      %vm623 = vmand %vm573, %vm599
      %vm624 = vmand %vm574, %vm600
      %vm625 = vmand %vm575, %vm601
      %vm626 = vmand %vm576, %vm602
      %vm627 = vmand %vm577, %vm603
      %vm628 = vmand %vm578, %vm604
      %vm629 = vmand %vm579, %vm605
      %v630 = vsel %vm606, 0, %v528
      %v631 = vsel %vm607, 0, %v529
      %v632 = vsel %vm608, 0, %v530
      %v633 = vsel %vm609, 0, %v531
      %v634 = vsel %vm610, 0, %v532
      %v635 = vsel %vm611, 0, %v533
      %v636 = vsel %vm612, 0, %v534
      %v637 = vsel %vm613, 0, %v535
      %v638 = vsel %vm614, 0, %v536
      %v639 = vsel %vm615, 0, %v537
      %v640 = vsel %vm616, 0, %v538
      %v641 = vsel %vm617, 0, %v539
      %v642 = vsel %vm618, 0, %v540
      %v643 = vsel %vm619, 0, %v541
      %v644 = vsel %vm620, 0, %v542
      %v645 = vsel %vm621, 0, %v543
      %v646 = vsel %vm622, 0, %v544
      %v647 = vsel %vm623, 0, %v545
      %v648 = vsel %vm624, 0, %v546
      %v649 = vsel %vm625, 0, %v547
      %v650 = vsel %vm626, 0, %v548
      %v651 = vsel %vm627, 0, %v549
      %v652 = vsel %vm628, 0, %v550
      %v653 = vsel %vm629, 0, %v551
      %s654 = sadd.s32 %s450, 2
      %s655 = sld [smem:[#allocation5 + %s654]]
      %s656 = sld [smem:[#allocation6 + %s654]]
      %v657 = vstv %s655
      %vm658 = vcmp.ge.s32.totalorder %v426, %v657
      %vm659 = vcmp.ge.s32.totalorder %v427, %v657
      %vm660 = vcmp.ge.s32.totalorder %v428, %v657
      %vm661 = vcmp.ge.s32.totalorder %v429, %v657
      %vm662 = vcmp.ge.s32.totalorder %v430, %v657
      %vm663 = vcmp.ge.s32.totalorder %v431, %v657
      %vm664 = vcmp.ge.s32.totalorder %v432, %v657
      %vm665 = vcmp.ge.s32.totalorder %v433, %v657
      %vm666 = vcmp.ge.s32.totalorder %v434, %v657
      %vm667 = vcmp.ge.s32.totalorder %v435, %v657
      %vm668 = vcmp.ge.s32.totalorder %v436, %v657
      %vm669 = vcmp.ge.s32.totalorder %v437, %v657
      %vm670 = vcmp.ge.s32.totalorder %v438, %v657
      %vm671 = vcmp.ge.s32.totalorder %v439, %v657
      %vm672 = vcmp.ge.s32.totalorder %v440, %v657
      %vm673 = vcmp.ge.s32.totalorder %v441, %v657
      %vm674 = vcmp.ge.s32.totalorder %v442, %v657
      %vm675 = vcmp.ge.s32.totalorder %v443, %v657
      %vm676 = vcmp.ge.s32.totalorder %v444, %v657
      %vm677 = vcmp.ge.s32.totalorder %v445, %v657
      %vm678 = vcmp.ge.s32.totalorder %v446, %v657
      %vm679 = vcmp.ge.s32.totalorder %v447, %v657
      %vm680 = vcmp.ge.s32.totalorder %v448, %v657
      %vm681 = vcmp.ge.s32.totalorder %v449, %v657
      %s682 = sadd.s32 %s655, %s656
      %v683 = vstv %s682
      %vm684 = vcmp.lt.s32.totalorder %v426, %v683
      %vm685 = vcmp.lt.s32.totalorder %v427, %v683
      %vm686 = vcmp.lt.s32.totalorder %v428, %v683
      %vm687 = vcmp.lt.s32.totalorder %v429, %v683
      %vm688 = vcmp.lt.s32.totalorder %v430, %v683
      %vm689 = vcmp.lt.s32.totalorder %v431, %v683
      %vm690 = vcmp.lt.s32.totalorder %v432, %v683
      %vm691 = vcmp.lt.s32.totalorder %v433, %v683
      %vm692 = vcmp.lt.s32.totalorder %v434, %v683
      %vm693 = vcmp.lt.s32.totalorder %v435, %v683
      %vm694 = vcmp.lt.s32.totalorder %v436, %v683
      %vm695 = vcmp.lt.s32.totalorder %v437, %v683
      %vm696 = vcmp.lt.s32.totalorder %v438, %v683
      %vm697 = vcmp.lt.s32.totalorder %v439, %v683
      %vm698 = vcmp.lt.s32.totalorder %v440, %v683
      %vm699 = vcmp.lt.s32.totalorder %v441, %v683
      %vm700 = vcmp.lt.s32.totalorder %v442, %v683
      %vm701 = vcmp.lt.s32.totalorder %v443, %v683
      %vm702 = vcmp.lt.s32.totalorder %v444, %v683
      %vm703 = vcmp.lt.s32.totalorder %v445, %v683
      %vm704 = vcmp.lt.s32.totalorder %v446, %v683
      %vm705 = vcmp.lt.s32.totalorder %v447, %v683
      %vm706 = vcmp.lt.s32.totalorder %v448, %v683
      %vm707 = vcmp.lt.s32.totalorder %v449, %v683
      %vm708 = vmand %vm658, %vm684
      %vm709 = vmand %vm659, %vm685
      %vm710 = vmand %vm660, %vm686
      %vm711 = vmand %vm661, %vm687
      %vm712 = vmand %vm662, %vm688
      %vm713 = vmand %vm663, %vm689
      %vm714 = vmand %vm664, %vm690
      %vm715 = vmand %vm665, %vm691
      %vm716 = vmand %vm666, %vm692
      %vm717 = vmand %vm667, %vm693
      %vm718 = vmand %vm668, %vm694
      %vm719 = vmand %vm669, %vm695
      %vm720 = vmand %vm670, %vm696
      %vm721 = vmand %vm671, %vm697
      %vm722 = vmand %vm672, %vm698
      %vm723 = vmand %vm673, %vm699
      %vm724 = vmand %vm674, %vm700
      %vm725 = vmand %vm675, %vm701
      %vm726 = vmand %vm676, %vm702
      %vm727 = vmand %vm677, %vm703
      %vm728 = vmand %vm678, %vm704
      %vm729 = vmand %vm679, %vm705
      %vm730 = vmand %vm680, %vm706
      %vm731 = vmand %vm681, %vm707
      %v732 = vsel %vm708, 0, %v630
      %v733 = vsel %vm709, 0, %v631
      %v734 = vsel %vm710, 0, %v632
      %v735 = vsel %vm711, 0, %v633
      %v736 = vsel %vm712, 0, %v634
      %v737 = vsel %vm713, 0, %v635
      %v738 = vsel %vm714, 0, %v636
      %v739 = vsel %vm715, 0, %v637
      %v740 = vsel %vm716, 0, %v638
      %v741 = vsel %vm717, 0, %v639
      %v742 = vsel %vm718, 0, %v640
      %v743 = vsel %vm719, 0, %v641
      %v744 = vsel %vm720, 0, %v642
      %v745 = vsel %vm721, 0, %v643
      %v746 = vsel %vm722, 0, %v644
      %v747 = vsel %vm723, 0, %v645
      %v748 = vsel %vm724, 0, %v646
      %v749 = vsel %vm725, 0, %v647
      %v750 = vsel %vm726, 0, %v648
      %v751 = vsel %vm727, 0, %v649
      %v752 = vsel %vm728, 0, %v650
      %v753 = vsel %vm729, 0, %v651
      %v754 = vsel %vm730, 0, %v652
      %v755 = vsel %vm731, 0, %v653
      %s756 = sadd.s32 %s450, 3
      %s757 = sld [smem:[#allocation5 + %s756]]
      %s758 = sld [smem:[#allocation6 + %s756]]
      %v759 = vstv %s757
      %vm760 = vcmp.ge.s32.totalorder %v426, %v759
      %vm761 = vcmp.ge.s32.totalorder %v427, %v759
      %vm762 = vcmp.ge.s32.totalorder %v428, %v759
      %vm763 = vcmp.ge.s32.totalorder %v429, %v759
      %vm764 = vcmp.ge.s32.totalorder %v430, %v759
      %vm765 = vcmp.ge.s32.totalorder %v431, %v759
      %vm766 = vcmp.ge.s32.totalorder %v432, %v759
      %vm767 = vcmp.ge.s32.totalorder %v433, %v759
      %vm768 = vcmp.ge.s32.totalorder %v434, %v759
      %vm769 = vcmp.ge.s32.totalorder %v435, %v759
      %vm770 = vcmp.ge.s32.totalorder %v436, %v759
      %vm771 = vcmp.ge.s32.totalorder %v437, %v759
      %vm772 = vcmp.ge.s32.totalorder %v438, %v759
      %vm773 = vcmp.ge.s32.totalorder %v439, %v759
      %vm774 = vcmp.ge.s32.totalorder %v440, %v759
      %vm775 = vcmp.ge.s32.totalorder %v441, %v759
      %vm776 = vcmp.ge.s32.totalorder %v442, %v759
      %vm777 = vcmp.ge.s32.totalorder %v443, %v759
      %vm778 = vcmp.ge.s32.totalorder %v444, %v759
      %vm779 = vcmp.ge.s32.totalorder %v445, %v759
      %vm780 = vcmp.ge.s32.totalorder %v446, %v759
      %vm781 = vcmp.ge.s32.totalorder %v447, %v759
      %vm782 = vcmp.ge.s32.totalorder %v448, %v759
      %vm783 = vcmp.ge.s32.totalorder %v449, %v759
      %s784 = sadd.s32 %s757, %s758
      %v785 = vstv %s784
      %vm786 = vcmp.lt.s32.totalorder %v426, %v785
      %vm787 = vcmp.lt.s32.totalorder %v427, %v785
      %vm788 = vcmp.lt.s32.totalorder %v428, %v785
      %vm789 = vcmp.lt.s32.totalorder %v429, %v785
      %vm790 = vcmp.lt.s32.totalorder %v430, %v785
      %vm791 = vcmp.lt.s32.totalorder %v431, %v785
      %vm792 = vcmp.lt.s32.totalorder %v432, %v785
      %vm793 = vcmp.lt.s32.totalorder %v433, %v785
      %vm794 = vcmp.lt.s32.totalorder %v434, %v785
      %vm795 = vcmp.lt.s32.totalorder %v435, %v785
      %vm796 = vcmp.lt.s32.totalorder %v436, %v785
      %vm797 = vcmp.lt.s32.totalorder %v437, %v785
      %vm798 = vcmp.lt.s32.totalorder %v438, %v785
      %vm799 = vcmp.lt.s32.totalorder %v439, %v785
      %vm800 = vcmp.lt.s32.totalorder %v440, %v785
      %vm801 = vcmp.lt.s32.totalorder %v441, %v785
      %vm802 = vcmp.lt.s32.totalorder %v442, %v785
      %vm803 = vcmp.lt.s32.totalorder %v443, %v785
      %vm804 = vcmp.lt.s32.totalorder %v444, %v785
      %vm805 = vcmp.lt.s32.totalorder %v445, %v785
      %vm806 = vcmp.lt.s32.totalorder %v446, %v785
      %vm807 = vcmp.lt.s32.totalorder %v447, %v785
      %vm808 = vcmp.lt.s32.totalorder %v448, %v785
      %vm809 = vcmp.lt.s32.totalorder %v449, %v785
      %vm810 = vmand %vm760, %vm786
      %vm811 = vmand %vm761, %vm787
      %vm812 = vmand %vm762, %vm788
      %vm813 = vmand %vm763, %vm789
      %vm814 = vmand %vm764, %vm790
      %vm815 = vmand %vm765, %vm791
      %vm816 = vmand %vm766, %vm792
      %vm817 = vmand %vm767, %vm793
      %vm818 = vmand %vm768, %vm794
      %vm819 = vmand %vm769, %vm795
      %vm820 = vmand %vm770, %vm796
      %vm821 = vmand %vm771, %vm797
      %vm822 = vmand %vm772, %vm798
      %vm823 = vmand %vm773, %vm799
      %vm824 = vmand %vm774, %vm800
      %vm825 = vmand %vm775, %vm801
      %vm826 = vmand %vm776, %vm802
      %vm827 = vmand %vm777, %vm803
      %vm828 = vmand %vm778, %vm804
      %vm829 = vmand %vm779, %vm805
      %vm830 = vmand %vm780, %vm806
      %vm831 = vmand %vm781, %vm807
      %vm832 = vmand %vm782, %vm808
      %vm833 = vmand %vm783, %vm809
      %v834 = vsel %vm810, 0, %v732
      %v835 = vsel %vm811, 0, %v733
      %v836 = vsel %vm812, 0, %v734
      %v837 = vsel %vm813, 0, %v735
      %v838 = vsel %vm814, 0, %v736
      %v839 = vsel %vm815, 0, %v737
      %v840 = vsel %vm816, 0, %v738
      %v841 = vsel %vm817, 0, %v739
      %v842 = vsel %vm818, 0, %v740
      %v843 = vsel %vm819, 0, %v741
      %v844 = vsel %vm820, 0, %v742
      %v845 = vsel %vm821, 0, %v743
      %v846 = vsel %vm822, 0, %v744
      %v847 = vsel %vm823, 0, %v745
      %v848 = vsel %vm824, 0, %v746
      %v849 = vsel %vm825, 0, %v747
      %v850 = vsel %vm826, 0, %v748
      %v851 = vsel %vm827, 0, %v749
      %v852 = vsel %vm828, 0, %v750
      %v853 = vsel %vm829, 0, %v751
      %v854 = vsel %vm830, 0, %v752
      %v855 = vsel %vm831, 0, %v753
      %v856 = vsel %vm832, 0, %v754
      %v857 = vsel %vm833, 0, %v755
      %s858 = sadd.s32 %s450, 4
      %s859 = sld [smem:[#allocation5 + %s858]]
      %s860 = sld [smem:[#allocation6 + %s858]]
      %v861 = vstv %s859
      %vm862 = vcmp.ge.s32.totalorder %v426, %v861
      %vm863 = vcmp.ge.s32.totalorder %v427, %v861
      %vm864 = vcmp.ge.s32.totalorder %v428, %v861
      %vm865 = vcmp.ge.s32.totalorder %v429, %v861
      %vm866 = vcmp.ge.s32.totalorder %v430, %v861
      %vm867 = vcmp.ge.s32.totalorder %v431, %v861
      %vm868 = vcmp.ge.s32.totalorder %v432, %v861
      %vm869 = vcmp.ge.s32.totalorder %v433, %v861
      %vm870 = vcmp.ge.s32.totalorder %v434, %v861
      %vm871 = vcmp.ge.s32.totalorder %v435, %v861
      %vm872 = vcmp.ge.s32.totalorder %v436, %v861
      %vm873 = vcmp.ge.s32.totalorder %v437, %v861
      %vm874 = vcmp.ge.s32.totalorder %v438, %v861
      %vm875 = vcmp.ge.s32.totalorder %v439, %v861
      %vm876 = vcmp.ge.s32.totalorder %v440, %v861
      %vm877 = vcmp.ge.s32.totalorder %v441, %v861
      %vm878 = vcmp.ge.s32.totalorder %v442, %v861
      %vm879 = vcmp.ge.s32.totalorder %v443, %v861
      %vm880 = vcmp.ge.s32.totalorder %v444, %v861
      %vm881 = vcmp.ge.s32.totalorder %v445, %v861
      %vm882 = vcmp.ge.s32.totalorder %v446, %v861
      %vm883 = vcmp.ge.s32.totalorder %v447, %v861
      %vm884 = vcmp.ge.s32.totalorder %v448, %v861
      %vm885 = vcmp.ge.s32.totalorder %v449, %v861
      %s886 = sadd.s32 %s859, %s860
      %v887 = vstv %s886
      %vm888 = vcmp.lt.s32.totalorder %v426, %v887
      %vm889 = vcmp.lt.s32.totalorder %v427, %v887
      %vm890 = vcmp.lt.s32.totalorder %v428, %v887
      %vm891 = vcmp.lt.s32.totalorder %v429, %v887
      %vm892 = vcmp.lt.s32.totalorder %v430, %v887
      %vm893 = vcmp.lt.s32.totalorder %v431, %v887
      %vm894 = vcmp.lt.s32.totalorder %v432, %v887
      %vm895 = vcmp.lt.s32.totalorder %v433, %v887
      %vm896 = vcmp.lt.s32.totalorder %v434, %v887
      %vm897 = vcmp.lt.s32.totalorder %v435, %v887
      %vm898 = vcmp.lt.s32.totalorder %v436, %v887
      %vm899 = vcmp.lt.s32.totalorder %v437, %v887
      %vm900 = vcmp.lt.s32.totalorder %v438, %v887
      %vm901 = vcmp.lt.s32.totalorder %v439, %v887
      %vm902 = vcmp.lt.s32.totalorder %v440, %v887
      %vm903 = vcmp.lt.s32.totalorder %v441, %v887
      %vm904 = vcmp.lt.s32.totalorder %v442, %v887
      %vm905 = vcmp.lt.s32.totalorder %v443, %v887
      %vm906 = vcmp.lt.s32.totalorder %v444, %v887
      %vm907 = vcmp.lt.s32.totalorder %v445, %v887
      %vm908 = vcmp.lt.s32.totalorder %v446, %v887
      %vm909 = vcmp.lt.s32.totalorder %v447, %v887
      %vm910 = vcmp.lt.s32.totalorder %v448, %v887
      %vm911 = vcmp.lt.s32.totalorder %v449, %v887
      %vm912 = vmand %vm862, %vm888
      %vm913 = vmand %vm863, %vm889
      %vm914 = vmand %vm864, %vm890
      %vm915 = vmand %vm865, %vm891
      %vm916 = vmand %vm866, %vm892
      %vm917 = vmand %vm867, %vm893
      %vm918 = vmand %vm868, %vm894
      %vm919 = vmand %vm869, %vm895
      %vm920 = vmand %vm870, %vm896
      %vm921 = vmand %vm871, %vm897
      %vm922 = vmand %vm872, %vm898
      %vm923 = vmand %vm873, %vm899
      %vm924 = vmand %vm874, %vm900
      %vm925 = vmand %vm875, %vm901
      %vm926 = vmand %vm876, %vm902
      %vm927 = vmand %vm877, %vm903
      %vm928 = vmand %vm878, %vm904
      %vm929 = vmand %vm879, %vm905
      %vm930 = vmand %vm880, %vm906
      %vm931 = vmand %vm881, %vm907
      %vm932 = vmand %vm882, %vm908
      %vm933 = vmand %vm883, %vm909
      %vm934 = vmand %vm884, %vm910
      %vm935 = vmand %vm885, %vm911
      %v936 = vsel %vm912, 0, %v834
      %v937 = vsel %vm913, 0, %v835
      %v938 = vsel %vm914, 0, %v836
      %v939 = vsel %vm915, 0, %v837
      %v940 = vsel %vm916, 0, %v838
      %v941 = vsel %vm917, 0, %v839
      %v942 = vsel %vm918, 0, %v840
      %v943 = vsel %vm919, 0, %v841
      %v944 = vsel %vm920, 0, %v842
      %v945 = vsel %vm921, 0, %v843
      %v946 = vsel %vm922, 0, %v844
      %v947 = vsel %vm923, 0, %v845
      %v948 = vsel %vm924, 0, %v846
      %v949 = vsel %vm925, 0, %v847
      %v950 = vsel %vm926, 0, %v848
      %v951 = vsel %vm927, 0, %v849
      %v952 = vsel %vm928, 0, %v850
      %v953 = vsel %vm929, 0, %v851
      %v954 = vsel %vm930, 0, %v852
      %v955 = vsel %vm931, 0, %v853
      %v956 = vsel %vm932, 0, %v854
      %v957 = vsel %vm933, 0, %v855
      %v958 = vsel %vm934, 0, %v856
      %v959 = vsel %vm935, 0, %v857
      %s960 = sadd.s32 %s450, 5
      %s961 = sld [smem:[#allocation5 + %s960]]
      %s962 = sld [smem:[#allocation6 + %s960]]
      %v963 = vstv %s961
      %vm964 = vcmp.ge.s32.totalorder %v426, %v963
      %vm965 = vcmp.ge.s32.totalorder %v427, %v963
      %vm966 = vcmp.ge.s32.totalorder %v428, %v963
      %vm967 = vcmp.ge.s32.totalorder %v429, %v963
      %vm968 = vcmp.ge.s32.totalorder %v430, %v963
      %vm969 = vcmp.ge.s32.totalorder %v431, %v963
      %vm970 = vcmp.ge.s32.totalorder %v432, %v963
      %vm971 = vcmp.ge.s32.totalorder %v433, %v963
      %vm972 = vcmp.ge.s32.totalorder %v434, %v963
      %vm973 = vcmp.ge.s32.totalorder %v435, %v963
      %vm974 = vcmp.ge.s32.totalorder %v436, %v963
      %vm975 = vcmp.ge.s32.totalorder %v437, %v963
      %vm976 = vcmp.ge.s32.totalorder %v438, %v963
      %vm977 = vcmp.ge.s32.totalorder %v439, %v963
      %vm978 = vcmp.ge.s32.totalorder %v440, %v963
      %vm979 = vcmp.ge.s32.totalorder %v441, %v963
      %vm980 = vcmp.ge.s32.totalorder %v442, %v963
      %vm981 = vcmp.ge.s32.totalorder %v443, %v963
      %vm982 = vcmp.ge.s32.totalorder %v444, %v963
      %vm983 = vcmp.ge.s32.totalorder %v445, %v963
      %vm984 = vcmp.ge.s32.totalorder %v446, %v963
      %vm985 = vcmp.ge.s32.totalorder %v447, %v963
      %vm986 = vcmp.ge.s32.totalorder %v448, %v963
      %vm987 = vcmp.ge.s32.totalorder %v449, %v963
      %s988 = sadd.s32 %s961, %s962
      %v989 = vstv %s988
      %vm990 = vcmp.lt.s32.totalorder %v426, %v989
      %vm991 = vcmp.lt.s32.totalorder %v427, %v989
      %vm992 = vcmp.lt.s32.totalorder %v428, %v989
      %vm993 = vcmp.lt.s32.totalorder %v429, %v989
      %vm994 = vcmp.lt.s32.totalorder %v430, %v989
      %vm995 = vcmp.lt.s32.totalorder %v431, %v989
      %vm996 = vcmp.lt.s32.totalorder %v432, %v989
      %vm997 = vcmp.lt.s32.totalorder %v433, %v989
      %vm998 = vcmp.lt.s32.totalorder %v434, %v989
      %vm999 = vcmp.lt.s32.totalorder %v435, %v989
      %vm1000 = vcmp.lt.s32.totalorder %v436, %v989
      %vm1001 = vcmp.lt.s32.totalorder %v437, %v989
      %vm1002 = vcmp.lt.s32.totalorder %v438, %v989
      %vm1003 = vcmp.lt.s32.totalorder %v439, %v989
      %vm1004 = vcmp.lt.s32.totalorder %v440, %v989
      %vm1005 = vcmp.lt.s32.totalorder %v441, %v989
      %vm1006 = vcmp.lt.s32.totalorder %v442, %v989
      %vm1007 = vcmp.lt.s32.totalorder %v443, %v989
      %vm1008 = vcmp.lt.s32.totalorder %v444, %v989
      %vm1009 = vcmp.lt.s32.totalorder %v445, %v989
      %vm1010 = vcmp.lt.s32.totalorder %v446, %v989
      %vm1011 = vcmp.lt.s32.totalorder %v447, %v989
      %vm1012 = vcmp.lt.s32.totalorder %v448, %v989
      %vm1013 = vcmp.lt.s32.totalorder %v449, %v989
      %vm1014 = vmand %vm964, %vm990
      %vm1015 = vmand %vm965, %vm991
      %vm1016 = vmand %vm966, %vm992
      %vm1017 = vmand %vm967, %vm993
      %vm1018 = vmand %vm968, %vm994
      %vm1019 = vmand %vm969, %vm995
      %vm1020 = vmand %vm970, %vm996
      %vm1021 = vmand %vm971, %vm997
      %vm1022 = vmand %vm972, %vm998
      %vm1023 = vmand %vm973, %vm999
      %vm1024 = vmand %vm974, %vm1000
      %vm1025 = vmand %vm975, %vm1001
      %vm1026 = vmand %vm976, %vm1002
      %vm1027 = vmand %vm977, %vm1003
      %vm1028 = vmand %vm978, %vm1004
      %vm1029 = vmand %vm979, %vm1005
      %vm1030 = vmand %vm980, %vm1006
      %vm1031 = vmand %vm981, %vm1007
      %vm1032 = vmand %vm982, %vm1008
      %vm1033 = vmand %vm983, %vm1009
      %vm1034 = vmand %vm984, %vm1010
      %vm1035 = vmand %vm985, %vm1011
      %vm1036 = vmand %vm986, %vm1012
      %vm1037 = vmand %vm987, %vm1013
      %v1038 = vsel %vm1014, 0, %v936
      %v1039 = vsel %vm1015, 0, %v937
      %v1040 = vsel %vm1016, 0, %v938
      %v1041 = vsel %vm1017, 0, %v939
      %v1042 = vsel %vm1018, 0, %v940
      %v1043 = vsel %vm1019, 0, %v941
      %v1044 = vsel %vm1020, 0, %v942
      %v1045 = vsel %vm1021, 0, %v943
      %v1046 = vsel %vm1022, 0, %v944
      %v1047 = vsel %vm1023, 0, %v945
      %v1048 = vsel %vm1024, 0, %v946
      %v1049 = vsel %vm1025, 0, %v947
      %v1050 = vsel %vm1026, 0, %v948
      %v1051 = vsel %vm1027, 0, %v949
      %v1052 = vsel %vm1028, 0, %v950
      %v1053 = vsel %vm1029, 0, %v951
      %v1054 = vsel %vm1030, 0, %v952
      %v1055 = vsel %vm1031, 0, %v953
      %v1056 = vsel %vm1032, 0, %v954
      %v1057 = vsel %vm1033, 0, %v955
      %v1058 = vsel %vm1034, 0, %v956
      %v1059 = vsel %vm1035, 0, %v957
      %v1060 = vsel %vm1036, 0, %v958
      %v1061 = vsel %vm1037, 0, %v959
      %s1062 = sadd.s32 %s450, 6
      %s1063 = sld [smem:[#allocation5 + %s1062]]
      %s1064 = sld [smem:[#allocation6 + %s1062]]
      %v1065 = vstv %s1063
      %vm1066 = vcmp.ge.s32.totalorder %v426, %v1065
      %vm1067 = vcmp.ge.s32.totalorder %v427, %v1065
      %vm1068 = vcmp.ge.s32.totalorder %v428, %v1065
      %vm1069 = vcmp.ge.s32.totalorder %v429, %v1065
      %vm1070 = vcmp.ge.s32.totalorder %v430, %v1065
      %vm1071 = vcmp.ge.s32.totalorder %v431, %v1065
      %vm1072 = vcmp.ge.s32.totalorder %v432, %v1065
      %vm1073 = vcmp.ge.s32.totalorder %v433, %v1065
      %vm1074 = vcmp.ge.s32.totalorder %v434, %v1065
      %vm1075 = vcmp.ge.s32.totalorder %v435, %v1065
      %vm1076 = vcmp.ge.s32.totalorder %v436, %v1065
      %vm1077 = vcmp.ge.s32.totalorder %v437, %v1065
      %vm1078 = vcmp.ge.s32.totalorder %v438, %v1065
      %vm1079 = vcmp.ge.s32.totalorder %v439, %v1065
      %vm1080 = vcmp.ge.s32.totalorder %v440, %v1065
      %vm1081 = vcmp.ge.s32.totalorder %v441, %v1065
      %vm1082 = vcmp.ge.s32.totalorder %v442, %v1065
      %vm1083 = vcmp.ge.s32.totalorder %v443, %v1065
      %vm1084 = vcmp.ge.s32.totalorder %v444, %v1065
      %vm1085 = vcmp.ge.s32.totalorder %v445, %v1065
      %vm1086 = vcmp.ge.s32.totalorder %v446, %v1065
      %vm1087 = vcmp.ge.s32.totalorder %v447, %v1065
      %vm1088 = vcmp.ge.s32.totalorder %v448, %v1065
      %vm1089 = vcmp.ge.s32.totalorder %v449, %v1065
      %s1090 = sadd.s32 %s1063, %s1064
      %v1091 = vstv %s1090
      %vm1092 = vcmp.lt.s32.totalorder %v426, %v1091
      %vm1093 = vcmp.lt.s32.totalorder %v427, %v1091
      %vm1094 = vcmp.lt.s32.totalorder %v428, %v1091
      %vm1095 = vcmp.lt.s32.totalorder %v429, %v1091
      %vm1096 = vcmp.lt.s32.totalorder %v430, %v1091
      %vm1097 = vcmp.lt.s32.totalorder %v431, %v1091
      %vm1098 = vcmp.lt.s32.totalorder %v432, %v1091
      %vm1099 = vcmp.lt.s32.totalorder %v433, %v1091
      %vm1100 = vcmp.lt.s32.totalorder %v434, %v1091
      %vm1101 = vcmp.lt.s32.totalorder %v435, %v1091
      %vm1102 = vcmp.lt.s32.totalorder %v436, %v1091
      %vm1103 = vcmp.lt.s32.totalorder %v437, %v1091
      %vm1104 = vcmp.lt.s32.totalorder %v438, %v1091
      %vm1105 = vcmp.lt.s32.totalorder %v439, %v1091
      %vm1106 = vcmp.lt.s32.totalorder %v440, %v1091
      %vm1107 = vcmp.lt.s32.totalorder %v441, %v1091
      %vm1108 = vcmp.lt.s32.totalorder %v442, %v1091
      %vm1109 = vcmp.lt.s32.totalorder %v443, %v1091
      %vm1110 = vcmp.lt.s32.totalorder %v444, %v1091
      %vm1111 = vcmp.lt.s32.totalorder %v445, %v1091
      %vm1112 = vcmp.lt.s32.totalorder %v446, %v1091
      %vm1113 = vcmp.lt.s32.totalorder %v447, %v1091
      %vm1114 = vcmp.lt.s32.totalorder %v448, %v1091
      %vm1115 = vcmp.lt.s32.totalorder %v449, %v1091
      %vm1116 = vmand %vm1066, %vm1092
      %vm1117 = vmand %vm1067, %vm1093
      %vm1118 = vmand %vm1068, %vm1094
      %vm1119 = vmand %vm1069, %vm1095
      %vm1120 = vmand %vm1070, %vm1096
      %vm1121 = vmand %vm1071, %vm1097
      %vm1122 = vmand %vm1072, %vm1098
      %vm1123 = vmand %vm1073, %vm1099
      %vm1124 = vmand %vm1074, %vm1100
      %vm1125 = vmand %vm1075, %vm1101
      %vm1126 = vmand %vm1076, %vm1102
      %vm1127 = vmand %vm1077, %vm1103
      %vm1128 = vmand %vm1078, %vm1104
      %vm1129 = vmand %vm1079, %vm1105
      %vm1130 = vmand %vm1080, %vm1106
      %vm1131 = vmand %vm1081, %vm1107
      %vm1132 = vmand %vm1082, %vm1108
      %vm1133 = vmand %vm1083, %vm1109
      %vm1134 = vmand %vm1084, %vm1110
      %vm1135 = vmand %vm1085, %vm1111
      %vm1136 = vmand %vm1086, %vm1112
      %vm1137 = vmand %vm1087, %vm1113
      %vm1138 = vmand %vm1088, %vm1114
      %vm1139 = vmand %vm1089, %vm1115
      %v1140 = vsel %vm1116, 0, %v1038
      %v1141 = vsel %vm1117, 0, %v1039
      %v1142 = vsel %vm1118, 0, %v1040
      %v1143 = vsel %vm1119, 0, %v1041
      %v1144 = vsel %vm1120, 0, %v1042
      %v1145 = vsel %vm1121, 0, %v1043
      %v1146 = vsel %vm1122, 0, %v1044
      %v1147 = vsel %vm1123, 0, %v1045
      %v1148 = vsel %vm1124, 0, %v1046
      %v1149 = vsel %vm1125, 0, %v1047
      %v1150 = vsel %vm1126, 0, %v1048
      %v1151 = vsel %vm1127, 0, %v1049
      %v1152 = vsel %vm1128, 0, %v1050
      %v1153 = vsel %vm1129, 0, %v1051
      %v1154 = vsel %vm1130, 0, %v1052
      %v1155 = vsel %vm1131, 0, %v1053
      %v1156 = vsel %vm1132, 0, %v1054
      %v1157 = vsel %vm1133, 0, %v1055
      %v1158 = vsel %vm1134, 0, %v1056
      %v1159 = vsel %vm1135, 0, %v1057
      %v1160 = vsel %vm1136, 0, %v1058
      %v1161 = vsel %vm1137, 0, %v1059
      %v1162 = vsel %vm1138, 0, %v1060
      %v1163 = vsel %vm1139, 0, %v1061
      %s1164 = sadd.s32 %s450, 7
      %s1165 = sld [smem:[#allocation5 + %s1164]]
      %s1166 = sld [smem:[#allocation6 + %s1164]]
      %v1167 = vstv %s1165
      %vm1168 = vcmp.ge.s32.totalorder %v426, %v1167
      %vm1169 = vcmp.ge.s32.totalorder %v427, %v1167
      %vm1170 = vcmp.ge.s32.totalorder %v428, %v1167
      %vm1171 = vcmp.ge.s32.totalorder %v429, %v1167
      %vm1172 = vcmp.ge.s32.totalorder %v430, %v1167
      %vm1173 = vcmp.ge.s32.totalorder %v431, %v1167
      %vm1174 = vcmp.ge.s32.totalorder %v432, %v1167
      %vm1175 = vcmp.ge.s32.totalorder %v433, %v1167
      %vm1176 = vcmp.ge.s32.totalorder %v434, %v1167
      %vm1177 = vcmp.ge.s32.totalorder %v435, %v1167
      %vm1178 = vcmp.ge.s32.totalorder %v436, %v1167
      %vm1179 = vcmp.ge.s32.totalorder %v437, %v1167
      %vm1180 = vcmp.ge.s32.totalorder %v438, %v1167
      %vm1181 = vcmp.ge.s32.totalorder %v439, %v1167
      %vm1182 = vcmp.ge.s32.totalorder %v440, %v1167
      %vm1183 = vcmp.ge.s32.totalorder %v441, %v1167
      %vm1184 = vcmp.ge.s32.totalorder %v442, %v1167
      %vm1185 = vcmp.ge.s32.totalorder %v443, %v1167
      %vm1186 = vcmp.ge.s32.totalorder %v444, %v1167
      %vm1187 = vcmp.ge.s32.totalorder %v445, %v1167
      %vm1188 = vcmp.ge.s32.totalorder %v446, %v1167
      %vm1189 = vcmp.ge.s32.totalorder %v447, %v1167
      %vm1190 = vcmp.ge.s32.totalorder %v448, %v1167
      %vm1191 = vcmp.ge.s32.totalorder %v449, %v1167
      %s1192 = sadd.s32 %s1165, %s1166
      %v1193 = vstv %s1192
      %vm1194 = vcmp.lt.s32.totalorder %v426, %v1193
      %vm1195 = vcmp.lt.s32.totalorder %v427, %v1193
      %vm1196 = vcmp.lt.s32.totalorder %v428, %v1193
      %vm1197 = vcmp.lt.s32.totalorder %v429, %v1193
      %vm1198 = vcmp.lt.s32.totalorder %v430, %v1193
      %vm1199 = vcmp.lt.s32.totalorder %v431, %v1193
      %vm1200 = vcmp.lt.s32.totalorder %v432, %v1193
      %vm1201 = vcmp.lt.s32.totalorder %v433, %v1193
      %vm1202 = vcmp.lt.s32.totalorder %v434, %v1193
      %vm1203 = vcmp.lt.s32.totalorder %v435, %v1193
      %vm1204 = vcmp.lt.s32.totalorder %v436, %v1193
      %vm1205 = vcmp.lt.s32.totalorder %v437, %v1193
      %vm1206 = vcmp.lt.s32.totalorder %v438, %v1193
      %vm1207 = vcmp.lt.s32.totalorder %v439, %v1193
      %vm1208 = vcmp.lt.s32.totalorder %v440, %v1193
      %vm1209 = vcmp.lt.s32.totalorder %v441, %v1193
      %vm1210 = vcmp.lt.s32.totalorder %v442, %v1193
      %vm1211 = vcmp.lt.s32.totalorder %v443, %v1193
      %vm1212 = vcmp.lt.s32.totalorder %v444, %v1193
      %vm1213 = vcmp.lt.s32.totalorder %v445, %v1193
      %vm1214 = vcmp.lt.s32.totalorder %v446, %v1193
      %vm1215 = vcmp.lt.s32.totalorder %v447, %v1193
      %vm1216 = vcmp.lt.s32.totalorder %v448, %v1193
      %vm1217 = vcmp.lt.s32.totalorder %v449, %v1193
      %vm1218 = vmand %vm1168, %vm1194
      %vm1219 = vmand %vm1169, %vm1195
      %vm1220 = vmand %vm1170, %vm1196
      %vm1221 = vmand %vm1171, %vm1197
      %vm1222 = vmand %vm1172, %vm1198
      %vm1223 = vmand %vm1173, %vm1199
      %vm1224 = vmand %vm1174, %vm1200
      %vm1225 = vmand %vm1175, %vm1201
      %vm1226 = vmand %vm1176, %vm1202
      %vm1227 = vmand %vm1177, %vm1203
      %vm1228 = vmand %vm1178, %vm1204
      %vm1229 = vmand %vm1179, %vm1205
      %vm1230 = vmand %vm1180, %vm1206
      %vm1231 = vmand %vm1181, %vm1207
      %vm1232 = vmand %vm1182, %vm1208
      %vm1233 = vmand %vm1183, %vm1209
      %vm1234 = vmand %vm1184, %vm1210
      %vm1235 = vmand %vm1185, %vm1211
      %vm1236 = vmand %vm1186, %vm1212
      %vm1237 = vmand %vm1187, %vm1213
      %vm1238 = vmand %vm1188, %vm1214
      %vm1239 = vmand %vm1189, %vm1215
      %vm1240 = vmand %vm1190, %vm1216
      %vm1241 = vmand %vm1191, %vm1217
      %v1242 = vsel %vm1218, 0, %v1140
      %v1243 = vsel %vm1219, 0, %v1141
      %v1244 = vsel %vm1220, 0, %v1142
      %v1245 = vsel %vm1221, 0, %v1143
      %v1246 = vsel %vm1222, 0, %v1144
      %v1247 = vsel %vm1223, 0, %v1145
      %v1248 = vsel %vm1224, 0, %v1146
      %v1249 = vsel %vm1225, 0, %v1147
      %v1250 = vsel %vm1226, 0, %v1148
      %v1251 = vsel %vm1227, 0, %v1149
      %v1252 = vsel %vm1228, 0, %v1150
      %v1253 = vsel %vm1229, 0, %v1151
      %v1254 = vsel %vm1230, 0, %v1152
      %v1255 = vsel %vm1231, 0, %v1153
      %v1256 = vsel %vm1232, 0, %v1154
      %v1257 = vsel %vm1233, 0, %v1155
      %v1258 = vsel %vm1234, 0, %v1156
      %v1259 = vsel %vm1235, 0, %v1157
      %v1260 = vsel %vm1236, 0, %v1158
      %v1261 = vsel %vm1237, 0, %v1159
      %v1262 = vsel %vm1238, 0, %v1160
      %v1263 = vsel %vm1239, 0, %v1161
      %v1264 = vsel %vm1240, 0, %v1162
      %v1265 = vsel %vm1241, 0, %v1163
      %s1266 = sadd.s32 %s450, 8
      %s1267 = sld [smem:[#allocation5 + %s1266]]
      %s1268 = sld [smem:[#allocation6 + %s1266]]
      %v1269 = vstv %s1267
      %vm1270 = vcmp.ge.s32.totalorder %v426, %v1269
      %vm1271 = vcmp.ge.s32.totalorder %v427, %v1269
      %vm1272 = vcmp.ge.s32.totalorder %v428, %v1269
      %vm1273 = vcmp.ge.s32.totalorder %v429, %v1269
      %vm1274 = vcmp.ge.s32.totalorder %v430, %v1269
      %vm1275 = vcmp.ge.s32.totalorder %v431, %v1269
      %vm1276 = vcmp.ge.s32.totalorder %v432, %v1269
      %vm1277 = vcmp.ge.s32.totalorder %v433, %v1269
      %vm1278 = vcmp.ge.s32.totalorder %v434, %v1269
      %vm1279 = vcmp.ge.s32.totalorder %v435, %v1269
      %vm1280 = vcmp.ge.s32.totalorder %v436, %v1269
      %vm1281 = vcmp.ge.s32.totalorder %v437, %v1269
      %vm1282 = vcmp.ge.s32.totalorder %v438, %v1269
      %vm1283 = vcmp.ge.s32.totalorder %v439, %v1269
      %vm1284 = vcmp.ge.s32.totalorder %v440, %v1269
      %vm1285 = vcmp.ge.s32.totalorder %v441, %v1269
      %vm1286 = vcmp.ge.s32.totalorder %v442, %v1269
      %vm1287 = vcmp.ge.s32.totalorder %v443, %v1269
      %vm1288 = vcmp.ge.s32.totalorder %v444, %v1269
      %vm1289 = vcmp.ge.s32.totalorder %v445, %v1269
      %vm1290 = vcmp.ge.s32.totalorder %v446, %v1269
      %vm1291 = vcmp.ge.s32.totalorder %v447, %v1269
      %vm1292 = vcmp.ge.s32.totalorder %v448, %v1269
      %vm1293 = vcmp.ge.s32.totalorder %v449, %v1269
      %s1294 = sadd.s32 %s1267, %s1268
      %v1295 = vstv %s1294
      %vm1296 = vcmp.lt.s32.totalorder %v426, %v1295
      %vm1297 = vcmp.lt.s32.totalorder %v427, %v1295
      %vm1298 = vcmp.lt.s32.totalorder %v428, %v1295
      %vm1299 = vcmp.lt.s32.totalorder %v429, %v1295
      %vm1300 = vcmp.lt.s32.totalorder %v430, %v1295
      %vm1301 = vcmp.lt.s32.totalorder %v431, %v1295
      %vm1302 = vcmp.lt.s32.totalorder %v432, %v1295
      %vm1303 = vcmp.lt.s32.totalorder %v433, %v1295
      %vm1304 = vcmp.lt.s32.totalorder %v434, %v1295
      %vm1305 = vcmp.lt.s32.totalorder %v435, %v1295
      %vm1306 = vcmp.lt.s32.totalorder %v436, %v1295
      %vm1307 = vcmp.lt.s32.totalorder %v437, %v1295
      %vm1308 = vcmp.lt.s32.totalorder %v438, %v1295
      %vm1309 = vcmp.lt.s32.totalorder %v439, %v1295
      %vm1310 = vcmp.lt.s32.totalorder %v440, %v1295
      %vm1311 = vcmp.lt.s32.totalorder %v441, %v1295
      %vm1312 = vcmp.lt.s32.totalorder %v442, %v1295
      %vm1313 = vcmp.lt.s32.totalorder %v443, %v1295
      %vm1314 = vcmp.lt.s32.totalorder %v444, %v1295
      %vm1315 = vcmp.lt.s32.totalorder %v445, %v1295
      %vm1316 = vcmp.lt.s32.totalorder %v446, %v1295
      %vm1317 = vcmp.lt.s32.totalorder %v447, %v1295
      %vm1318 = vcmp.lt.s32.totalorder %v448, %v1295
      %vm1319 = vcmp.lt.s32.totalorder %v449, %v1295
      %vm1320 = vmand %vm1270, %vm1296
      %vm1321 = vmand %vm1271, %vm1297
      %vm1322 = vmand %vm1272, %vm1298
      %vm1323 = vmand %vm1273, %vm1299
      %vm1324 = vmand %vm1274, %vm1300
      %vm1325 = vmand %vm1275, %vm1301
      %vm1326 = vmand %vm1276, %vm1302
      %vm1327 = vmand %vm1277, %vm1303
      %vm1328 = vmand %vm1278, %vm1304
      %vm1329 = vmand %vm1279, %vm1305
      %vm1330 = vmand %vm1280, %vm1306
      %vm1331 = vmand %vm1281, %vm1307
      %vm1332 = vmand %vm1282, %vm1308
      %vm1333 = vmand %vm1283, %vm1309
      %vm1334 = vmand %vm1284, %vm1310
      %vm1335 = vmand %vm1285, %vm1311
      %vm1336 = vmand %vm1286, %vm1312
      %vm1337 = vmand %vm1287, %vm1313
      %vm1338 = vmand %vm1288, %vm1314
      %vm1339 = vmand %vm1289, %vm1315
      %vm1340 = vmand %vm1290, %vm1316
      %vm1341 = vmand %vm1291, %vm1317
      %vm1342 = vmand %vm1292, %vm1318
      %vm1343 = vmand %vm1293, %vm1319
      %v1344 = vsel %vm1320, 0, %v1242
      %v1345 = vsel %vm1321, 0, %v1243
      %v1346 = vsel %vm1322, 0, %v1244
      %v1347 = vsel %vm1323, 0, %v1245
      %v1348 = vsel %vm1324, 0, %v1246
      %v1349 = vsel %vm1325, 0, %v1247
      %v1350 = vsel %vm1326, 0, %v1248
      %v1351 = vsel %vm1327, 0, %v1249
      %v1352 = vsel %vm1328, 0, %v1250
      %v1353 = vsel %vm1329, 0, %v1251
      %v1354 = vsel %vm1330, 0, %v1252
      %v1355 = vsel %vm1331, 0, %v1253
      %v1356 = vsel %vm1332, 0, %v1254
      %v1357 = vsel %vm1333, 0, %v1255
      %v1358 = vsel %vm1334, 0, %v1256
      %v1359 = vsel %vm1335, 0, %v1257
      %v1360 = vsel %vm1336, 0, %v1258
      %v1361 = vsel %vm1337, 0, %v1259
      %v1362 = vsel %vm1338, 0, %v1260
      %v1363 = vsel %vm1339, 0, %v1261
      %v1364 = vsel %vm1340, 0, %v1262
      %v1365 = vsel %vm1341, 0, %v1263
      %v1366 = vsel %vm1342, 0, %v1264
      %v1367 = vsel %vm1343, 0, %v1265
      %s1368 = sadd.s32 %s450, 9
      %s1369 = sld [smem:[#allocation5 + %s1368]]
      %s1370 = sld [smem:[#allocation6 + %s1368]]
      %v1371 = vstv %s1369
      %vm1372 = vcmp.ge.s32.totalorder %v426, %v1371
      %vm1373 = vcmp.ge.s32.totalorder %v427, %v1371
      %vm1374 = vcmp.ge.s32.totalorder %v428, %v1371
      %vm1375 = vcmp.ge.s32.totalorder %v429, %v1371
      %vm1376 = vcmp.ge.s32.totalorder %v430, %v1371
      %vm1377 = vcmp.ge.s32.totalorder %v431, %v1371
      %vm1378 = vcmp.ge.s32.totalorder %v432, %v1371
      %vm1379 = vcmp.ge.s32.totalorder %v433, %v1371
      %vm1380 = vcmp.ge.s32.totalorder %v434, %v1371
      %vm1381 = vcmp.ge.s32.totalorder %v435, %v1371
      %vm1382 = vcmp.ge.s32.totalorder %v436, %v1371
      %vm1383 = vcmp.ge.s32.totalorder %v437, %v1371
      %vm1384 = vcmp.ge.s32.totalorder %v438, %v1371
      %vm1385 = vcmp.ge.s32.totalorder %v439, %v1371
      %vm1386 = vcmp.ge.s32.totalorder %v440, %v1371
      %vm1387 = vcmp.ge.s32.totalorder %v441, %v1371
      %vm1388 = vcmp.ge.s32.totalorder %v442, %v1371
      %vm1389 = vcmp.ge.s32.totalorder %v443, %v1371
      %vm1390 = vcmp.ge.s32.totalorder %v444, %v1371
      %vm1391 = vcmp.ge.s32.totalorder %v445, %v1371
      %vm1392 = vcmp.ge.s32.totalorder %v446, %v1371
      %vm1393 = vcmp.ge.s32.totalorder %v447, %v1371
      %vm1394 = vcmp.ge.s32.totalorder %v448, %v1371
      %vm1395 = vcmp.ge.s32.totalorder %v449, %v1371
      %s1396 = sadd.s32 %s1369, %s1370
      %v1397 = vstv %s1396
      %vm1398 = vcmp.lt.s32.totalorder %v426, %v1397
      %vm1399 = vcmp.lt.s32.totalorder %v427, %v1397
      %vm1400 = vcmp.lt.s32.totalorder %v428, %v1397
      %vm1401 = vcmp.lt.s32.totalorder %v429, %v1397
      %vm1402 = vcmp.lt.s32.totalorder %v430, %v1397
      %vm1403 = vcmp.lt.s32.totalorder %v431, %v1397
      %vm1404 = vcmp.lt.s32.totalorder %v432, %v1397
      %vm1405 = vcmp.lt.s32.totalorder %v433, %v1397
      %vm1406 = vcmp.lt.s32.totalorder %v434, %v1397
      %vm1407 = vcmp.lt.s32.totalorder %v435, %v1397
      %vm1408 = vcmp.lt.s32.totalorder %v436, %v1397
      %vm1409 = vcmp.lt.s32.totalorder %v437, %v1397
      %vm1410 = vcmp.lt.s32.totalorder %v438, %v1397
      %vm1411 = vcmp.lt.s32.totalorder %v439, %v1397
      %vm1412 = vcmp.lt.s32.totalorder %v440, %v1397
      %vm1413 = vcmp.lt.s32.totalorder %v441, %v1397
      %vm1414 = vcmp.lt.s32.totalorder %v442, %v1397
      %vm1415 = vcmp.lt.s32.totalorder %v443, %v1397
      %vm1416 = vcmp.lt.s32.totalorder %v444, %v1397
      %vm1417 = vcmp.lt.s32.totalorder %v445, %v1397
      %vm1418 = vcmp.lt.s32.totalorder %v446, %v1397
      %vm1419 = vcmp.lt.s32.totalorder %v447, %v1397
      %vm1420 = vcmp.lt.s32.totalorder %v448, %v1397
      %vm1421 = vcmp.lt.s32.totalorder %v449, %v1397
      %vm1422 = vmand %vm1372, %vm1398
      %vm1423 = vmand %vm1373, %vm1399
      %vm1424 = vmand %vm1374, %vm1400
      %vm1425 = vmand %vm1375, %vm1401
      %vm1426 = vmand %vm1376, %vm1402
      %vm1427 = vmand %vm1377, %vm1403
      %vm1428 = vmand %vm1378, %vm1404
      %vm1429 = vmand %vm1379, %vm1405
      %vm1430 = vmand %vm1380, %vm1406
      %vm1431 = vmand %vm1381, %vm1407
      %vm1432 = vmand %vm1382, %vm1408
      %vm1433 = vmand %vm1383, %vm1409
      %vm1434 = vmand %vm1384, %vm1410
      %vm1435 = vmand %vm1385, %vm1411
      %vm1436 = vmand %vm1386, %vm1412
      %vm1437 = vmand %vm1387, %vm1413
      %vm1438 = vmand %vm1388, %vm1414
      %vm1439 = vmand %vm1389, %vm1415
      %vm1440 = vmand %vm1390, %vm1416
      %vm1441 = vmand %vm1391, %vm1417
      %vm1442 = vmand %vm1392, %vm1418
      %vm1443 = vmand %vm1393, %vm1419
      %vm1444 = vmand %vm1394, %vm1420
      %vm1445 = vmand %vm1395, %vm1421
      %v1446 = vsel %vm1422, 0, %v1344
      %v1447 = vsel %vm1423, 0, %v1345
      %v1448 = vsel %vm1424, 0, %v1346
      %v1449 = vsel %vm1425, 0, %v1347
      %v1450 = vsel %vm1426, 0, %v1348
      %v1451 = vsel %vm1427, 0, %v1349
      %v1452 = vsel %vm1428, 0, %v1350
      %v1453 = vsel %vm1429, 0, %v1351
      %v1454 = vsel %vm1430, 0, %v1352
      %v1455 = vsel %vm1431, 0, %v1353
      %v1456 = vsel %vm1432, 0, %v1354
      %v1457 = vsel %vm1433, 0, %v1355
      %v1458 = vsel %vm1434, 0, %v1356
      %v1459 = vsel %vm1435, 0, %v1357
      %v1460 = vsel %vm1436, 0, %v1358
      %v1461 = vsel %vm1437, 0, %v1359
      %v1462 = vsel %vm1438, 0, %v1360
      %v1463 = vsel %vm1439, 0, %v1361
      %v1464 = vsel %vm1440, 0, %v1362
      %v1465 = vsel %vm1441, 0, %v1363
      %v1466 = vsel %vm1442, 0, %v1364
      %v1467 = vsel %vm1443, 0, %v1365
      %v1468 = vsel %vm1444, 0, %v1366
      %v1469 = vsel %vm1445, 0, %v1367
      %v1470 = vshll.u32 %v1446, %v185
      %v1471 = vshll.u32 %v1447, %v185
      %v1472 = vshll.u32 %v1448, %v185
      %v1473 = vshll.u32 %v1449, %v185
      %v1474 = vshll.u32 %v1450, %v185
      %v1475 = vshll.u32 %v1451, %v185
      %v1476 = vshll.u32 %v1452, %v185
      %v1477 = vshll.u32 %v1453, %v185
      %v1478 = vshll.u32 %v1454, %v185
      %v1479 = vshll.u32 %v1455, %v185
      %v1480 = vshll.u32 %v1456, %v185
      %v1481 = vshll.u32 %v1457, %v185
      %v1482 = vshll.u32 %v1458, %v185
      %v1483 = vshll.u32 %v1459, %v185
      %v1484 = vshll.u32 %v1460, %v185
      %v1485 = vshll.u32 %v1461, %v185
      %v1486 = vshll.u32 %v1462, %v185
      %v1487 = vshll.u32 %v1463, %v185
      %v1488 = vshll.u32 %v1464, %v185
      %v1489 = vshll.u32 %v1465, %v185
      %v1490 = vshll.u32 %v1466, %v185
      %v1491 = vshll.u32 %v1467, %v185
      %v1492 = vshll.u32 %v1468, %v185
      %v1493 = vshll.u32 %v1469, %v185
      %vm1494 = vcmask 64512
      %v1495 = vsel %vm1494, %v1470, 0
      %v1496 = vand.u32 %v1495, 65535
      %v1497 = vshrl.u32 %v1495, 16
      %v1498 = vcvt.s32.f32 %v1496
      %v1499 = vcvt.s32.f32 %v1497
      %1500 = vadd.xlane.f32.xlu0 %v1498
      %v1501 = vpop.xlane.xlu0 %1500
      %1502 = vadd.xlane.f32.xlu0 %v1499
      %v1503 = vpop.xlane.xlu0 %1502
      %v1504 = vcvt.f32.s32 %v1501
      %v1505 = vcvt.f32.s32 %v1503
      %v1506 = vshll.u32 %v1505, 16
      %v1507 = vadd.s32 %v1506, %v1504
      %v1508 = vsel %vm1494, %v1471, 0
      %v1509 = vand.u32 %v1508, 65535
      %v1510 = vshrl.u32 %v1508, 16
      %v1511 = vcvt.s32.f32 %v1509
      %v1512 = vcvt.s32.f32 %v1510
      %1513 = vadd.xlane.f32.xlu0 %v1511
      %v1514 = vpop.xlane.xlu0 %1513
      %1515 = vadd.xlane.f32.xlu0 %v1512
      %v1516 = vpop.xlane.xlu0 %1515
      %v1517 = vcvt.f32.s32 %v1514
      %v1518 = vcvt.f32.s32 %v1516
      %v1519 = vshll.u32 %v1518, 16
      %v1520 = vadd.s32 %v1519, %v1517
      %v1521 = vsel %vm1494, %v1472, 0
      %v1522 = vand.u32 %v1521, 65535
      %v1523 = vshrl.u32 %v1521, 16
      %v1524 = vcvt.s32.f32 %v1522
      %v1525 = vcvt.s32.f32 %v1523
      %1526 = vadd.xlane.f32.xlu0 %v1524
      %v1527 = vpop.xlane.xlu0 %1526
      %1528 = vadd.xlane.f32.xlu0 %v1525
      %v1529 = vpop.xlane.xlu0 %1528
      %v1530 = vcvt.f32.s32 %v1527
      %v1531 = vcvt.f32.s32 %v1529
      %v1532 = vshll.u32 %v1531, 16
      %v1533 = vadd.s32 %v1532, %v1530
      %v1534 = vsel %vm1494, %v1473, 0
      %v1535 = vand.u32 %v1534, 65535
      %v1536 = vshrl.u32 %v1534, 16
      %v1537 = vcvt.s32.f32 %v1535
      %v1538 = vcvt.s32.f32 %v1536
      %1539 = vadd.xlane.f32.xlu0 %v1537
      %v1540 = vpop.xlane.xlu0 %1539
      %1541 = vadd.xlane.f32.xlu0 %v1538
      %v1542 = vpop.xlane.xlu0 %1541
      %v1543 = vcvt.f32.s32 %v1540
      %v1544 = vcvt.f32.s32 %v1542
      %v1545 = vshll.u32 %v1544, 16
      %v1546 = vadd.s32 %v1545, %v1543
      %v1547 = vsel %vm1494, %v1474, 0
      %v1548 = vand.u32 %v1547, 65535
      %v1549 = vshrl.u32 %v1547, 16
      %v1550 = vcvt.s32.f32 %v1548
      %v1551 = vcvt.s32.f32 %v1549
      %1552 = vadd.xlane.f32.xlu0 %v1550
      %v1553 = vpop.xlane.xlu0 %1552
      %1554 = vadd.xlane.f32.xlu0 %v1551
      %v1555 = vpop.xlane.xlu0 %1554
      %v1556 = vcvt.f32.s32 %v1553
      %v1557 = vcvt.f32.s32 %v1555
      %v1558 = vshll.u32 %v1557, 16
      %v1559 = vadd.s32 %v1558, %v1556
      %v1560 = vsel %vm1494, %v1475, 0
      %v1561 = vand.u32 %v1560, 65535
      %v1562 = vshrl.u32 %v1560, 16
      %v1563 = vcvt.s32.f32 %v1561
      %v1564 = vcvt.s32.f32 %v1562
      %1565 = vadd.xlane.f32.xlu0 %v1563
      %v1566 = vpop.xlane.xlu0 %1565
      %1567 = vadd.xlane.f32.xlu0 %v1564
      %v1568 = vpop.xlane.xlu0 %1567
      %v1569 = vcvt.f32.s32 %v1566
      %v1570 = vcvt.f32.s32 %v1568
      %v1571 = vshll.u32 %v1570, 16
      %v1572 = vadd.s32 %v1571, %v1569
      %v1573 = vsel %vm1494, %v1476, 0
      %v1574 = vand.u32 %v1573, 65535
      %v1575 = vshrl.u32 %v1573, 16
      %v1576 = vcvt.s32.f32 %v1574
      %v1577 = vcvt.s32.f32 %v1575
      %1578 = vadd.xlane.f32.xlu0 %v1576
      %v1579 = vpop.xlane.xlu0 %1578
      %1580 = vadd.xlane.f32.xlu0 %v1577
      %v1581 = vpop.xlane.xlu0 %1580
      %v1582 = vcvt.f32.s32 %v1579
      %v1583 = vcvt.f32.s32 %v1581
      %v1584 = vshll.u32 %v1583, 16
      %v1585 = vadd.s32 %v1584, %v1582
      %v1586 = vsel %vm1494, %v1477, 0
      %v1587 = vand.u32 %v1586, 65535
      %v1588 = vshrl.u32 %v1586, 16
      %v1589 = vcvt.s32.f32 %v1587
      %v1590 = vcvt.s32.f32 %v1588
      %1591 = vadd.xlane.f32.xlu0 %v1589
      %v1592 = vpop.xlane.xlu0 %1591
      %1593 = vadd.xlane.f32.xlu0 %v1590
      %v1594 = vpop.xlane.xlu0 %1593
      %v1595 = vcvt.f32.s32 %v1592
      %v1596 = vcvt.f32.s32 %v1594
      %v1597 = vshll.u32 %v1596, 16
      %v1598 = vadd.s32 %v1597, %v1595
      %v1599 = vsel %vm1494, %v1478, 0
      %v1600 = vand.u32 %v1599, 65535
      %v1601 = vshrl.u32 %v1599, 16
      %v1602 = vcvt.s32.f32 %v1600
      %v1603 = vcvt.s32.f32 %v1601
      %1604 = vadd.xlane.f32.xlu0 %v1602
      %v1605 = vpop.xlane.xlu0 %1604
      %1606 = vadd.xlane.f32.xlu0 %v1603
      %v1607 = vpop.xlane.xlu0 %1606
      %v1608 = vcvt.f32.s32 %v1605
      %v1609 = vcvt.f32.s32 %v1607
      %v1610 = vshll.u32 %v1609, 16
      %v1611 = vadd.s32 %v1610, %v1608
      %v1612 = vsel %vm1494, %v1479, 0
      %v1613 = vand.u32 %v1612, 65535
      %v1614 = vshrl.u32 %v1612, 16
      %v1615 = vcvt.s32.f32 %v1613
      %v1616 = vcvt.s32.f32 %v1614
      %1617 = vadd.xlane.f32.xlu0 %v1615
      %v1618 = vpop.xlane.xlu0 %1617
      %1619 = vadd.xlane.f32.xlu0 %v1616
      %v1620 = vpop.xlane.xlu0 %1619
      %v1621 = vcvt.f32.s32 %v1618
      %v1622 = vcvt.f32.s32 %v1620
      %v1623 = vshll.u32 %v1622, 16
      %v1624 = vadd.s32 %v1623, %v1621
      %v1625 = vsel %vm1494, %v1480, 0
      %v1626 = vand.u32 %v1625, 65535
      %v1627 = vshrl.u32 %v1625, 16
      %v1628 = vcvt.s32.f32 %v1626
      %v1629 = vcvt.s32.f32 %v1627
      %1630 = vadd.xlane.f32.xlu0 %v1628
      %v1631 = vpop.xlane.xlu0 %1630
      %1632 = vadd.xlane.f32.xlu0 %v1629
      %v1633 = vpop.xlane.xlu0 %1632
      %v1634 = vcvt.f32.s32 %v1631
      %v1635 = vcvt.f32.s32 %v1633
      %v1636 = vshll.u32 %v1635, 16
      %v1637 = vadd.s32 %v1636, %v1634
      %v1638 = vsel %vm1494, %v1481, 0
      %v1639 = vand.u32 %v1638, 65535
      %v1640 = vshrl.u32 %v1638, 16
      %v1641 = vcvt.s32.f32 %v1639
      %v1642 = vcvt.s32.f32 %v1640
      %1643 = vadd.xlane.f32.xlu0 %v1641
      %v1644 = vpop.xlane.xlu0 %1643
      %1645 = vadd.xlane.f32.xlu0 %v1642
      %v1646 = vpop.xlane.xlu0 %1645
      %v1647 = vcvt.f32.s32 %v1644
      %v1648 = vcvt.f32.s32 %v1646
      %v1649 = vshll.u32 %v1648, 16
      %v1650 = vadd.s32 %v1649, %v1647
      %v1651 = vsel %vm1494, %v1482, 0
      %v1652 = vand.u32 %v1651, 65535
      %v1653 = vshrl.u32 %v1651, 16
      %v1654 = vcvt.s32.f32 %v1652
      %v1655 = vcvt.s32.f32 %v1653
      %1656 = vadd.xlane.f32.xlu0 %v1654
      %v1657 = vpop.xlane.xlu0 %1656
      %1658 = vadd.xlane.f32.xlu0 %v1655
      %v1659 = vpop.xlane.xlu0 %1658
      %v1660 = vcvt.f32.s32 %v1657
      %v1661 = vcvt.f32.s32 %v1659
      %v1662 = vshll.u32 %v1661, 16
      %v1663 = vadd.s32 %v1662, %v1660
      %v1664 = vsel %vm1494, %v1483, 0
      %v1665 = vand.u32 %v1664, 65535
      %v1666 = vshrl.u32 %v1664, 16
      %v1667 = vcvt.s32.f32 %v1665
      %v1668 = vcvt.s32.f32 %v1666
      %1669 = vadd.xlane.f32.xlu0 %v1667
      %v1670 = vpop.xlane.xlu0 %1669
      %1671 = vadd.xlane.f32.xlu0 %v1668
      %v1672 = vpop.xlane.xlu0 %1671
      %v1673 = vcvt.f32.s32 %v1670
      %v1674 = vcvt.f32.s32 %v1672
      %v1675 = vshll.u32 %v1674, 16
      %v1676 = vadd.s32 %v1675, %v1673
      %v1677 = vsel %vm1494, %v1484, 0
      %v1678 = vand.u32 %v1677, 65535
      %v1679 = vshrl.u32 %v1677, 16
      %v1680 = vcvt.s32.f32 %v1678
      %v1681 = vcvt.s32.f32 %v1679
      %1682 = vadd.xlane.f32.xlu0 %v1680
      %v1683 = vpop.xlane.xlu0 %1682
      %1684 = vadd.xlane.f32.xlu0 %v1681
      %v1685 = vpop.xlane.xlu0 %1684
      %v1686 = vcvt.f32.s32 %v1683
      %v1687 = vcvt.f32.s32 %v1685
      %v1688 = vshll.u32 %v1687, 16
      %v1689 = vadd.s32 %v1688, %v1686
      %v1690 = vsel %vm1494, %v1485, 0
      %v1691 = vand.u32 %v1690, 65535
      %v1692 = vshrl.u32 %v1690, 16
      %v1693 = vcvt.s32.f32 %v1691
      %v1694 = vcvt.s32.f32 %v1692
      %1695 = vadd.xlane.f32.xlu0 %v1693
      %v1696 = vpop.xlane.xlu0 %1695
      %1697 = vadd.xlane.f32.xlu0 %v1694
      %v1698 = vpop.xlane.xlu0 %1697
      %v1699 = vcvt.f32.s32 %v1696
      %v1700 = vcvt.f32.s32 %v1698
      %v1701 = vshll.u32 %v1700, 16
      %v1702 = vadd.s32 %v1701, %v1699
      %v1703 = vsel %vm1494, %v1486, 0
      %v1704 = vand.u32 %v1703, 65535
      %v1705 = vshrl.u32 %v1703, 16
      %v1706 = vcvt.s32.f32 %v1704
      %v1707 = vcvt.s32.f32 %v1705
      %1708 = vadd.xlane.f32.xlu0 %v1706
      %v1709 = vpop.xlane.xlu0 %1708
      %1710 = vadd.xlane.f32.xlu0 %v1707
      %v1711 = vpop.xlane.xlu0 %1710
      %v1712 = vcvt.f32.s32 %v1709
      %v1713 = vcvt.f32.s32 %v1711
      %v1714 = vshll.u32 %v1713, 16
      %v1715 = vadd.s32 %v1714, %v1712
      %v1716 = vsel %vm1494, %v1487, 0
      %v1717 = vand.u32 %v1716, 65535
      %v1718 = vshrl.u32 %v1716, 16
      %v1719 = vcvt.s32.f32 %v1717
      %v1720 = vcvt.s32.f32 %v1718
      %1721 = vadd.xlane.f32.xlu0 %v1719
      %v1722 = vpop.xlane.xlu0 %1721
      %1723 = vadd.xlane.f32.xlu0 %v1720
      %v1724 = vpop.xlane.xlu0 %1723
      %v1725 = vcvt.f32.s32 %v1722
      %v1726 = vcvt.f32.s32 %v1724
      %v1727 = vshll.u32 %v1726, 16
      %v1728 = vadd.s32 %v1727, %v1725
      %v1729 = vsel %vm1494, %v1488, 0
      %v1730 = vand.u32 %v1729, 65535
      %v1731 = vshrl.u32 %v1729, 16
      %v1732 = vcvt.s32.f32 %v1730
      %v1733 = vcvt.s32.f32 %v1731
      %1734 = vadd.xlane.f32.xlu0 %v1732
      %v1735 = vpop.xlane.xlu0 %1734
      %1736 = vadd.xlane.f32.xlu0 %v1733
      %v1737 = vpop.xlane.xlu0 %1736
      %v1738 = vcvt.f32.s32 %v1735
      %v1739 = vcvt.f32.s32 %v1737
      %v1740 = vshll.u32 %v1739, 16
      %v1741 = vadd.s32 %v1740, %v1738
      %v1742 = vsel %vm1494, %v1489, 0
      %v1743 = vand.u32 %v1742, 65535
      %v1744 = vshrl.u32 %v1742, 16
      %v1745 = vcvt.s32.f32 %v1743
      %v1746 = vcvt.s32.f32 %v1744
      %1747 = vadd.xlane.f32.xlu0 %v1745
      %v1748 = vpop.xlane.xlu0 %1747
      %1749 = vadd.xlane.f32.xlu0 %v1746
      %v1750 = vpop.xlane.xlu0 %1749
      %v1751 = vcvt.f32.s32 %v1748
      %v1752 = vcvt.f32.s32 %v1750
      %v1753 = vshll.u32 %v1752, 16
      %v1754 = vadd.s32 %v1753, %v1751
      %v1755 = vsel %vm1494, %v1490, 0
      %v1756 = vand.u32 %v1755, 65535
      %v1757 = vshrl.u32 %v1755, 16
      %v1758 = vcvt.s32.f32 %v1756
      %v1759 = vcvt.s32.f32 %v1757
      %1760 = vadd.xlane.f32.xlu0 %v1758
      %v1761 = vpop.xlane.xlu0 %1760
      %1762 = vadd.xlane.f32.xlu0 %v1759
      %v1763 = vpop.xlane.xlu0 %1762
      %v1764 = vcvt.f32.s32 %v1761
      %v1765 = vcvt.f32.s32 %v1763
      %v1766 = vshll.u32 %v1765, 16
      %v1767 = vadd.s32 %v1766, %v1764
      %v1768 = vsel %vm1494, %v1491, 0
      %v1769 = vand.u32 %v1768, 65535
      %v1770 = vshrl.u32 %v1768, 16
      %v1771 = vcvt.s32.f32 %v1769
      %v1772 = vcvt.s32.f32 %v1770
      %1773 = vadd.xlane.f32.xlu0 %v1771
      %v1774 = vpop.xlane.xlu0 %1773
      %1775 = vadd.xlane.f32.xlu0 %v1772
      %v1776 = vpop.xlane.xlu0 %1775
      %v1777 = vcvt.f32.s32 %v1774
      %v1778 = vcvt.f32.s32 %v1776
      %v1779 = vshll.u32 %v1778, 16
      %v1780 = vadd.s32 %v1779, %v1777
      %v1781 = vsel %vm1494, %v1492, 0
      %v1782 = vand.u32 %v1781, 65535
      %v1783 = vshrl.u32 %v1781, 16
      %v1784 = vcvt.s32.f32 %v1782
      %v1785 = vcvt.s32.f32 %v1783
      %1786 = vadd.xlane.f32.xlu0 %v1784
      %v1787 = vpop.xlane.xlu0 %1786
      %1788 = vadd.xlane.f32.xlu0 %v1785
      %v1789 = vpop.xlane.xlu0 %1788
      %v1790 = vcvt.f32.s32 %v1787
      %v1791 = vcvt.f32.s32 %v1789
      %v1792 = vshll.u32 %v1791, 16
      %v1793 = vadd.s32 %v1792, %v1790
      %v1794 = vsel %vm1494, %v1493, 0
      %v1795 = vand.u32 %v1794, 65535
      %v1796 = vshrl.u32 %v1794, 16
      %v1797 = vcvt.s32.f32 %v1795
      %v1798 = vcvt.s32.f32 %v1796
      %1799 = vadd.xlane.f32.xlu0 %v1797
      %v1800 = vpop.xlane.xlu0 %1799
      %1801 = vadd.xlane.f32.xlu0 %v1798
      %v1802 = vpop.xlane.xlu0 %1801
      %v1803 = vcvt.f32.s32 %v1800
      %v1804 = vcvt.f32.s32 %v1802
      %v1805 = vshll.u32 %v1804, 16
      %v1806 = vadd.s32 %v1805, %v1803
      %v1807 = vld [vmem:[%s170] sm:$0xff]
      %v1808 = vld [vmem:[%s170 + $0x8] sm:$0xff]
      %v1809 = vld [vmem:[%s170 + $0x10] sm:$0xff]
      %v1810 = vld [vmem:[%s170 + $0x18] sm:$0xff]
      %v1811 = vld [vmem:[%s170 + $0x20] sm:$0xff]
      %v1812 = vld [vmem:[%s170 + $0x28] sm:$0xff]
      %v1813 = vld [vmem:[%s170 + $0x30] sm:$0xff]
      %v1814 = vld [vmem:[%s170 + $0x38] sm:$0xff]
      %v1815 = vld [vmem:[%s170 + $0x40] sm:$0xff]
      %v1816 = vld [vmem:[%s170 + $0x48] sm:$0xff]
      %v1817 = vld [vmem:[%s170 + $0x50] sm:$0xff]
      %v1818 = vld [vmem:[%s170 + $0x58] sm:$0xff]
      %v1819 = vld [vmem:[%s170 + $0x60] sm:$0xff]
      %v1820 = vld [vmem:[%s170 + $0x68] sm:$0xff]
      %v1821 = vld [vmem:[%s170 + $0x70] sm:$0xff]
      %v1822 = vld [vmem:[%s170 + $0x78] sm:$0xff]
      %v1823 = vld [vmem:[%s170 + $0x80] sm:$0xff]
      %v1824 = vld [vmem:[%s170 + $0x88] sm:$0xff]
      %v1825 = vld [vmem:[%s170 + $0x90] sm:$0xff]
      %v1826 = vld [vmem:[%s170 + $0x98] sm:$0xff]
      %v1827 = vld [vmem:[%s170 + $0xa0] sm:$0xff]
      %v1828 = vld [vmem:[%s170 + $0xa8] sm:$0xff]
      %v1829 = vld [vmem:[%s170 + $0xb0] sm:$0xff]
      %v1830 = vld [vmem:[%s170 + $0xb8] sm:$0xff]
      %v1831 = vld [vmem:[%s170 + $0xc0] sm:$0xff]
      %v1832 = vld [vmem:[%s170 + $0xc8] sm:$0xff]
      %v1833 = vld [vmem:[%s170 + $0xd0] sm:$0xff]
      %v1834 = vld [vmem:[%s170 + $0xd8] sm:$0xff]
      %v1835 = vld [vmem:[%s170 + $0xe0] sm:$0xff]
      %v1836 = vld [vmem:[%s170 + $0xe8] sm:$0xff]
      %v1837 = vld [vmem:[%s170 + $0xf0] sm:$0xff]
      %v1838 = vld [vmem:[%s170 + $0xf8] sm:$0xff]
      %v1839 = vld [vmem:[%s170 + $0x100] sm:$0xff]
      %v1840 = vld [vmem:[%s170 + $0x108] sm:$0xff]
      %v1841 = vld [vmem:[%s170 + $0x110] sm:$0xff]
      %v1842 = vld [vmem:[%s170 + $0x118] sm:$0xff]
      %v1843 = vld [vmem:[%s170 + $0x120] sm:$0xff]
      %v1844 = vld [vmem:[%s170 + $0x128] sm:$0xff]
      %v1845 = vld [vmem:[%s170 + $0x130] sm:$0xff]
      %v1846 = vld [vmem:[%s170 + $0x138] sm:$0xff]
      %v1847 = vld [vmem:[%s170 + $0x140] sm:$0xff]
      %v1848 = vld [vmem:[%s170 + $0x148] sm:$0xff]
      %v1849 = vld [vmem:[%s170 + $0x150] sm:$0xff]
      %v1850 = vld [vmem:[%s170 + $0x158] sm:$0xff]
      %v1851 = vld [vmem:[%s170 + $0x160] sm:$0xff]
      %v1852 = vld [vmem:[%s170 + $0x168] sm:$0xff]
      %v1853 = vld [vmem:[%s170 + $0x170] sm:$0xff]
      %v1854 = vld [vmem:[%s170 + $0x178] sm:$0xff]
      %v1855 = vld [vmem:[%s170 + $0x180] sm:$0xff]
      %v1856 = vld [vmem:[%s170 + $0x188] sm:$0xff]
      %v1857 = vld [vmem:[%s170 + $0x190] sm:$0xff]
      %v1858 = vld [vmem:[%s170 + $0x198] sm:$0xff]
      %v1859 = vld [vmem:[%s170 + $0x1a0] sm:$0xff]
      %v1860 = vld [vmem:[%s170 + $0x1a8] sm:$0xff]
      %v1861 = vld [vmem:[%s170 + $0x1b0] sm:$0xff]
      %v1862 = vld [vmem:[%s170 + $0x1b8] sm:$0xff]
      %v1863 = vld [vmem:[%s170 + $0x1c0] sm:$0xff]
      %v1864 = vld [vmem:[%s170 + $0x1c8] sm:$0xff]
      %v1865 = vld [vmem:[%s170 + $0x1d0] sm:$0xff]
      %v1866 = vld [vmem:[%s170 + $0x1d8] sm:$0xff]
      %v1867 = vld [vmem:[%s170 + $0x1e0] sm:$0xff]
      %v1868 = vld [vmem:[%s170 + $0x1e8] sm:$0xff]
      %v1869 = vld [vmem:[%s170 + $0x1f0] sm:$0xff]
      %v1870 = vld [vmem:[%s170 + $0x1f8] sm:$0xff]
      %v1871 = vld [vmem:[%s170 + $0x200] sm:$0xff]
      %v1872 = vld [vmem:[%s170 + $0x208] sm:$0xff]
      %v1873 = vld [vmem:[%s170 + $0x210] sm:$0xff]
      %v1874 = vld [vmem:[%s170 + $0x218] sm:$0xff]
      %v1875 = vld [vmem:[%s170 + $0x220] sm:$0xff]
      %v1876 = vld [vmem:[%s170 + $0x228] sm:$0xff]
      %v1877 = vld [vmem:[%s170 + $0x230] sm:$0xff]
      %v1878 = vld [vmem:[%s170 + $0x238] sm:$0xff]
      %v1879 = vld [vmem:[%s170 + $0x240] sm:$0xff]
      %v1880 = vld [vmem:[%s170 + $0x248] sm:$0xff]
      %v1881 = vld [vmem:[%s170 + $0x250] sm:$0xff]
      %v1882 = vld [vmem:[%s170 + $0x258] sm:$0xff]
      %v1883 = vld [vmem:[%s170 + $0x260] sm:$0xff]
      %v1884 = vld [vmem:[%s170 + $0x268] sm:$0xff]
      %v1885 = vld [vmem:[%s170 + $0x270] sm:$0xff]
      %v1886 = vld [vmem:[%s170 + $0x278] sm:$0xff]
      %v1887 = vld [vmem:[%s170 + $0x280] sm:$0xff]
      %v1888 = vld [vmem:[%s170 + $0x288] sm:$0xff]
      %v1889 = vld [vmem:[%s170 + $0x290] sm:$0xff]
      %v1890 = vld [vmem:[%s170 + $0x298] sm:$0xff]
      %v1891 = vld [vmem:[%s170 + $0x2a0] sm:$0xff]
      %v1892 = vld [vmem:[%s170 + $0x2a8] sm:$0xff]
      %v1893 = vld [vmem:[%s170 + $0x2b0] sm:$0xff]
      %v1894 = vld [vmem:[%s170 + $0x2b8] sm:$0xff]
      %v1895 = vld [vmem:[%s170 + $0x2c0] sm:$0xff]
      %v1896 = vld [vmem:[%s170 + $0x2c8] sm:$0xff]
      %v1897 = vld [vmem:[%s170 + $0x2d0] sm:$0xff]
      %v1898 = vld [vmem:[%s170 + $0x2d8] sm:$0xff]
      %v1899 = vld [vmem:[%s170 + $0x2e0] sm:$0xff]
      %v1900 = vld [vmem:[%s170 + $0x2e8] sm:$0xff]
      %v1901 = vld [vmem:[%s170 + $0x2f0] sm:$0xff]
      %v1902 = vld [vmem:[%s170 + $0x2f8] sm:$0xff]
      %v1903 = vld [vmem:[%s170 + $0x300] sm:$0xff]
      %v1904 = vld [vmem:[%s170 + $0x308] sm:$0xff]
      %v1905 = vld [vmem:[%s170 + $0x310] sm:$0xff]
      %v1906 = vld [vmem:[%s170 + $0x318] sm:$0xff]
      %v1907 = vld [vmem:[%s170 + $0x320] sm:$0xff]
      %v1908 = vld [vmem:[%s170 + $0x328] sm:$0xff]
      %v1909 = vld [vmem:[%s170 + $0x330] sm:$0xff]
      %v1910 = vld [vmem:[%s170 + $0x338] sm:$0xff]
      %v1911 = vld [vmem:[%s170 + $0x340] sm:$0xff]
      %v1912 = vld [vmem:[%s170 + $0x348] sm:$0xff]
      %v1913 = vld [vmem:[%s170 + $0x350] sm:$0xff]
      %v1914 = vld [vmem:[%s170 + $0x358] sm:$0xff]
      %v1915 = vld [vmem:[%s170 + $0x360] sm:$0xff]
      %v1916 = vld [vmem:[%s170 + $0x368] sm:$0xff]
      %v1917 = vld [vmem:[%s170 + $0x370] sm:$0xff]
      %v1918 = vld [vmem:[%s170 + $0x378] sm:$0xff]
      %v1919 = vld [vmem:[%s170 + $0x380] sm:$0xff]
      %v1920 = vld [vmem:[%s170 + $0x388] sm:$0xff]
      %v1921 = vld [vmem:[%s170 + $0x390] sm:$0xff]
      %v1922 = vld [vmem:[%s170 + $0x398] sm:$0xff]
      %v1923 = vld [vmem:[%s170 + $0x3a0] sm:$0xff]
      %v1924 = vld [vmem:[%s170 + $0x3a8] sm:$0xff]
      %v1925 = vld [vmem:[%s170 + $0x3b0] sm:$0xff]
      %v1926 = vld [vmem:[%s170 + $0x3b8] sm:$0xff]
      %v1927 = vshra.s32 %v1507, %v285
      %v1928 = vshra.s32 %v1507, %v286
      %v1929 = vshra.s32 %v1507, %v287
      %v1930 = vshra.s32 %v1507, %v288
      %v1931 = vshra.s32 %v1507, %v289
      %v1932 = vshra.s32 %v1520, %v285
      %v1933 = vshra.s32 %v1520, %v286
      %v1934 = vshra.s32 %v1520, %v287
      %v1935 = vshra.s32 %v1520, %v288
      %v1936 = vshra.s32 %v1520, %v289
      %v1937 = vshra.s32 %v1533, %v285
      %v1938 = vshra.s32 %v1533, %v286
      %v1939 = vshra.s32 %v1533, %v287
      %v1940 = vshra.s32 %v1533, %v288
      %v1941 = vshra.s32 %v1533, %v289
      %v1942 = vshra.s32 %v1546, %v285
      %v1943 = vshra.s32 %v1546, %v286
      %v1944 = vshra.s32 %v1546, %v287
      %v1945 = vshra.s32 %v1546, %v288
      %v1946 = vshra.s32 %v1546, %v289
      %v1947 = vshra.s32 %v1559, %v285
      %v1948 = vshra.s32 %v1559, %v286
      %v1949 = vshra.s32 %v1559, %v287
      %v1950 = vshra.s32 %v1559, %v288
      %v1951 = vshra.s32 %v1559, %v289
      %v1952 = vshra.s32 %v1572, %v285
      %v1953 = vshra.s32 %v1572, %v286
      %v1954 = vshra.s32 %v1572, %v287
      %v1955 = vshra.s32 %v1572, %v288
      %v1956 = vshra.s32 %v1572, %v289
      %v1957 = vshra.s32 %v1585, %v285
      %v1958 = vshra.s32 %v1585, %v286
      %v1959 = vshra.s32 %v1585, %v287
      %v1960 = vshra.s32 %v1585, %v288
      %v1961 = vshra.s32 %v1585, %v289
      %v1962 = vshra.s32 %v1598, %v285
      %v1963 = vshra.s32 %v1598, %v286
      %v1964 = vshra.s32 %v1598, %v287
      %v1965 = vshra.s32 %v1598, %v288
      %v1966 = vshra.s32 %v1598, %v289
      %v1967 = vshra.s32 %v1611, %v285
      %v1968 = vshra.s32 %v1611, %v286
      %v1969 = vshra.s32 %v1611, %v287
      %v1970 = vshra.s32 %v1611, %v288
      %v1971 = vshra.s32 %v1611, %v289
      %v1972 = vshra.s32 %v1624, %v285
      %v1973 = vshra.s32 %v1624, %v286
      %v1974 = vshra.s32 %v1624, %v287
      %v1975 = vshra.s32 %v1624, %v288
      %v1976 = vshra.s32 %v1624, %v289
      %v1977 = vshra.s32 %v1637, %v285
      %v1978 = vshra.s32 %v1637, %v286
      %v1979 = vshra.s32 %v1637, %v287
      %v1980 = vshra.s32 %v1637, %v288
      %v1981 = vshra.s32 %v1637, %v289
      %v1982 = vshra.s32 %v1650, %v285
      %v1983 = vshra.s32 %v1650, %v286
      %v1984 = vshra.s32 %v1650, %v287
      %v1985 = vshra.s32 %v1650, %v288
      %v1986 = vshra.s32 %v1650, %v289
      %v1987 = vshra.s32 %v1663, %v285
      %v1988 = vshra.s32 %v1663, %v286
      %v1989 = vshra.s32 %v1663, %v287
      %v1990 = vshra.s32 %v1663, %v288
      %v1991 = vshra.s32 %v1663, %v289
      %v1992 = vshra.s32 %v1676, %v285
      %v1993 = vshra.s32 %v1676, %v286
      %v1994 = vshra.s32 %v1676, %v287
      %v1995 = vshra.s32 %v1676, %v288
      %v1996 = vshra.s32 %v1676, %v289
      %v1997 = vshra.s32 %v1689, %v285
      %v1998 = vshra.s32 %v1689, %v286
      %v1999 = vshra.s32 %v1689, %v287
      %v2000 = vshra.s32 %v1689, %v288
      %v2001 = vshra.s32 %v1689, %v289
      %v2002 = vshra.s32 %v1702, %v285
      %v2003 = vshra.s32 %v1702, %v286
      %v2004 = vshra.s32 %v1702, %v287
      %v2005 = vshra.s32 %v1702, %v288
      %v2006 = vshra.s32 %v1702, %v289
      %v2007 = vshra.s32 %v1715, %v285
      %v2008 = vshra.s32 %v1715, %v286
      %v2009 = vshra.s32 %v1715, %v287
      %v2010 = vshra.s32 %v1715, %v288
      %v2011 = vshra.s32 %v1715, %v289
      %v2012 = vshra.s32 %v1728, %v285
      %v2013 = vshra.s32 %v1728, %v286
      %v2014 = vshra.s32 %v1728, %v287
      %v2015 = vshra.s32 %v1728, %v288
      %v2016 = vshra.s32 %v1728, %v289
      %v2017 = vshra.s32 %v1741, %v285
      %v2018 = vshra.s32 %v1741, %v286
      %v2019 = vshra.s32 %v1741, %v287
      %v2020 = vshra.s32 %v1741, %v288
      %v2021 = vshra.s32 %v1741, %v289
      %v2022 = vshra.s32 %v1754, %v285
      %v2023 = vshra.s32 %v1754, %v286
      %v2024 = vshra.s32 %v1754, %v287
      %v2025 = vshra.s32 %v1754, %v288
      %v2026 = vshra.s32 %v1754, %v289
      %v2027 = vshra.s32 %v1767, %v285
      %v2028 = vshra.s32 %v1767, %v286
      %v2029 = vshra.s32 %v1767, %v287
      %v2030 = vshra.s32 %v1767, %v288
      %v2031 = vshra.s32 %v1767, %v289
      %v2032 = vshra.s32 %v1780, %v285
      %v2033 = vshra.s32 %v1780, %v286
      %v2034 = vshra.s32 %v1780, %v287
      %v2035 = vshra.s32 %v1780, %v288
      %v2036 = vshra.s32 %v1780, %v289
      %v2037 = vshra.s32 %v1793, %v285
      %v2038 = vshra.s32 %v1793, %v286
      %v2039 = vshra.s32 %v1793, %v287
      %v2040 = vshra.s32 %v1793, %v288
      %v2041 = vshra.s32 %v1793, %v289
      %v2042 = vshra.s32 %v1806, %v285
      %v2043 = vshra.s32 %v1806, %v286
      %v2044 = vshra.s32 %v1806, %v287
      %v2045 = vshra.s32 %v1806, %v288
      %v2046 = vshra.s32 %v1806, %v289
      %v2047 = vand.u32 %v1927, %v347
      %v2048 = vand.u32 %v1928, %v348
      %v2049 = vand.u32 %v1929, %v349
      %v2050 = vand.u32 %v1930, %v350
      %v2051 = vand.u32 %v1931, %v351
      %v2052 = vand.u32 %v1932, %v347
      %v2053 = vand.u32 %v1933, %v348
      %v2054 = vand.u32 %v1934, %v349
      %v2055 = vand.u32 %v1935, %v350
      %v2056 = vand.u32 %v1936, %v351
      %v2057 = vand.u32 %v1937, %v347
      %v2058 = vand.u32 %v1938, %v348
      %v2059 = vand.u32 %v1939, %v349
      %v2060 = vand.u32 %v1940, %v350
      %v2061 = vand.u32 %v1941, %v351
      %v2062 = vand.u32 %v1942, %v347
      %v2063 = vand.u32 %v1943, %v348
      %v2064 = vand.u32 %v1944, %v349
      %v2065 = vand.u32 %v1945, %v350
      %v2066 = vand.u32 %v1946, %v351
      %v2067 = vand.u32 %v1947, %v347
      %v2068 = vand.u32 %v1948, %v348
      %v2069 = vand.u32 %v1949, %v349
      %v2070 = vand.u32 %v1950, %v350
      %v2071 = vand.u32 %v1951, %v351
      %v2072 = vand.u32 %v1952, %v347
      %v2073 = vand.u32 %v1953, %v348
      %v2074 = vand.u32 %v1954, %v349
      %v2075 = vand.u32 %v1955, %v350
      %v2076 = vand.u32 %v1956, %v351
      %v2077 = vand.u32 %v1957, %v347
      %v2078 = vand.u32 %v1958, %v348
      %v2079 = vand.u32 %v1959, %v349
      %v2080 = vand.u32 %v1960, %v350
      %v2081 = vand.u32 %v1961, %v351
      %v2082 = vand.u32 %v1962, %v347
      %v2083 = vand.u32 %v1963, %v348
      %v2084 = vand.u32 %v1964, %v349
      %v2085 = vand.u32 %v1965, %v350
      %v2086 = vand.u32 %v1966, %v351
      %v2087 = vand.u32 %v1967, %v347
      %v2088 = vand.u32 %v1968, %v348
      %v2089 = vand.u32 %v1969, %v349
      %v2090 = vand.u32 %v1970, %v350
      %v2091 = vand.u32 %v1971, %v351
      %v2092 = vand.u32 %v1972, %v347
      %v2093 = vand.u32 %v1973, %v348
      %v2094 = vand.u32 %v1974, %v349
      %v2095 = vand.u32 %v1975, %v350
      %v2096 = vand.u32 %v1976, %v351
      %v2097 = vand.u32 %v1977, %v347
      %v2098 = vand.u32 %v1978, %v348
      %v2099 = vand.u32 %v1979, %v349
      %v2100 = vand.u32 %v1980, %v350
      %v2101 = vand.u32 %v1981, %v351
      %v2102 = vand.u32 %v1982, %v347
      %v2103 = vand.u32 %v1983, %v348
      %v2104 = vand.u32 %v1984, %v349
      %v2105 = vand.u32 %v1985, %v350
      %v2106 = vand.u32 %v1986, %v351
      %v2107 = vand.u32 %v1987, %v347
      %v2108 = vand.u32 %v1988, %v348
      %v2109 = vand.u32 %v1989, %v349
      %v2110 = vand.u32 %v1990, %v350
      %v2111 = vand.u32 %v1991, %v351
      %v2112 = vand.u32 %v1992, %v347
      %v2113 = vand.u32 %v1993, %v348
      %v2114 = vand.u32 %v1994, %v349
      %v2115 = vand.u32 %v1995, %v350
      %v2116 = vand.u32 %v1996, %v351
      %v2117 = vand.u32 %v1997, %v347
      %v2118 = vand.u32 %v1998, %v348
      %v2119 = vand.u32 %v1999, %v349
      %v2120 = vand.u32 %v2000, %v350
      %v2121 = vand.u32 %v2001, %v351
      %v2122 = vand.u32 %v2002, %v347
      %v2123 = vand.u32 %v2003, %v348
      %v2124 = vand.u32 %v2004, %v349
      %v2125 = vand.u32 %v2005, %v350
      %v2126 = vand.u32 %v2006, %v351
      %v2127 = vand.u32 %v2007, %v347
      %v2128 = vand.u32 %v2008, %v348
      %v2129 = vand.u32 %v2009, %v349
      %v2130 = vand.u32 %v2010, %v350
      %v2131 = vand.u32 %v2011, %v351
      %v2132 = vand.u32 %v2012, %v347
      %v2133 = vand.u32 %v2013, %v348
      %v2134 = vand.u32 %v2014, %v349
      %v2135 = vand.u32 %v2015, %v350
      %v2136 = vand.u32 %v2016, %v351
      %v2137 = vand.u32 %v2017, %v347
      %v2138 = vand.u32 %v2018, %v348
      %v2139 = vand.u32 %v2019, %v349
      %v2140 = vand.u32 %v2020, %v350
      %v2141 = vand.u32 %v2021, %v351
      %v2142 = vand.u32 %v2022, %v347
      %v2143 = vand.u32 %v2023, %v348
      %v2144 = vand.u32 %v2024, %v349
      %v2145 = vand.u32 %v2025, %v350
      %v2146 = vand.u32 %v2026, %v351
      %v2147 = vand.u32 %v2027, %v347
      %v2148 = vand.u32 %v2028, %v348
      %v2149 = vand.u32 %v2029, %v349
      %v2150 = vand.u32 %v2030, %v350
      %v2151 = vand.u32 %v2031, %v351
      %v2152 = vand.u32 %v2032, %v347
      %v2153 = vand.u32 %v2033, %v348
      %v2154 = vand.u32 %v2034, %v349
      %v2155 = vand.u32 %v2035, %v350
      %v2156 = vand.u32 %v2036, %v351
      %v2157 = vand.u32 %v2037, %v347
      %v2158 = vand.u32 %v2038, %v348
      %v2159 = vand.u32 %v2039, %v349
      %v2160 = vand.u32 %v2040, %v350
      %v2161 = vand.u32 %v2041, %v351
      %v2162 = vand.u32 %v2042, %v347
      %v2163 = vand.u32 %v2043, %v348
      %v2164 = vand.u32 %v2044, %v349
      %v2165 = vand.u32 %v2045, %v350
      %v2166 = vand.u32 %v2046, %v351
      %vm2167 = vcmp.ne.s32.totalorder %v2047, 0
      %vm2168 = vcmp.ne.s32.totalorder %v2048, 0
      %vm2169 = vcmp.ne.s32.totalorder %v2049, 0
      %vm2170 = vcmp.ne.s32.totalorder %v2050, 0
      %vm2171 = vcmp.ne.s32.totalorder %v2051, 0
      %vm2172 = vcmp.ne.s32.totalorder %v2052, 0
      %vm2173 = vcmp.ne.s32.totalorder %v2053, 0
      %vm2174 = vcmp.ne.s32.totalorder %v2054, 0
      %vm2175 = vcmp.ne.s32.totalorder %v2055, 0
      %vm2176 = vcmp.ne.s32.totalorder %v2056, 0
      %vm2177 = vcmp.ne.s32.totalorder %v2057, 0
      %vm2178 = vcmp.ne.s32.totalorder %v2058, 0
      %vm2179 = vcmp.ne.s32.totalorder %v2059, 0
      %vm2180 = vcmp.ne.s32.totalorder %v2060, 0
      %vm2181 = vcmp.ne.s32.totalorder %v2061, 0
      %vm2182 = vcmp.ne.s32.totalorder %v2062, 0
      %vm2183 = vcmp.ne.s32.totalorder %v2063, 0
      %vm2184 = vcmp.ne.s32.totalorder %v2064, 0
      %vm2185 = vcmp.ne.s32.totalorder %v2065, 0
      %vm2186 = vcmp.ne.s32.totalorder %v2066, 0
      %vm2187 = vcmp.ne.s32.totalorder %v2067, 0
      %vm2188 = vcmp.ne.s32.totalorder %v2068, 0
      %vm2189 = vcmp.ne.s32.totalorder %v2069, 0
      %vm2190 = vcmp.ne.s32.totalorder %v2070, 0
      %vm2191 = vcmp.ne.s32.totalorder %v2071, 0
      %vm2192 = vcmp.ne.s32.totalorder %v2072, 0
      %vm2193 = vcmp.ne.s32.totalorder %v2073, 0
      %vm2194 = vcmp.ne.s32.totalorder %v2074, 0
      %vm2195 = vcmp.ne.s32.totalorder %v2075, 0
      %vm2196 = vcmp.ne.s32.totalorder %v2076, 0
      %vm2197 = vcmp.ne.s32.totalorder %v2077, 0
      %vm2198 = vcmp.ne.s32.totalorder %v2078, 0
      %vm2199 = vcmp.ne.s32.totalorder %v2079, 0
      %vm2200 = vcmp.ne.s32.totalorder %v2080, 0
      %vm2201 = vcmp.ne.s32.totalorder %v2081, 0
      %vm2202 = vcmp.ne.s32.totalorder %v2082, 0
      %vm2203 = vcmp.ne.s32.totalorder %v2083, 0
      %vm2204 = vcmp.ne.s32.totalorder %v2084, 0
      %vm2205 = vcmp.ne.s32.totalorder %v2085, 0
      %vm2206 = vcmp.ne.s32.totalorder %v2086, 0
      %vm2207 = vcmp.ne.s32.totalorder %v2087, 0
      %vm2208 = vcmp.ne.s32.totalorder %v2088, 0
      %vm2209 = vcmp.ne.s32.totalorder %v2089, 0
      %vm2210 = vcmp.ne.s32.totalorder %v2090, 0
      %vm2211 = vcmp.ne.s32.totalorder %v2091, 0
      %vm2212 = vcmp.ne.s32.totalorder %v2092, 0
      %vm2213 = vcmp.ne.s32.totalorder %v2093, 0
      %vm2214 = vcmp.ne.s32.totalorder %v2094, 0
      %vm2215 = vcmp.ne.s32.totalorder %v2095, 0
      %vm2216 = vcmp.ne.s32.totalorder %v2096, 0
      %vm2217 = vcmp.ne.s32.totalorder %v2097, 0
      %vm2218 = vcmp.ne.s32.totalorder %v2098, 0
      %vm2219 = vcmp.ne.s32.totalorder %v2099, 0
      %vm2220 = vcmp.ne.s32.totalorder %v2100, 0
      %vm2221 = vcmp.ne.s32.totalorder %v2101, 0
      %vm2222 = vcmp.ne.s32.totalorder %v2102, 0
      %vm2223 = vcmp.ne.s32.totalorder %v2103, 0
      %vm2224 = vcmp.ne.s32.totalorder %v2104, 0
      %vm2225 = vcmp.ne.s32.totalorder %v2105, 0
      %vm2226 = vcmp.ne.s32.totalorder %v2106, 0
      %vm2227 = vcmp.ne.s32.totalorder %v2107, 0
      %vm2228 = vcmp.ne.s32.totalorder %v2108, 0
      %vm2229 = vcmp.ne.s32.totalorder %v2109, 0
      %vm2230 = vcmp.ne.s32.totalorder %v2110, 0
      %vm2231 = vcmp.ne.s32.totalorder %v2111, 0
      %vm2232 = vcmp.ne.s32.totalorder %v2112, 0
      %vm2233 = vcmp.ne.s32.totalorder %v2113, 0
      %vm2234 = vcmp.ne.s32.totalorder %v2114, 0
      %vm2235 = vcmp.ne.s32.totalorder %v2115, 0
      %vm2236 = vcmp.ne.s32.totalorder %v2116, 0
      %vm2237 = vcmp.ne.s32.totalorder %v2117, 0
      %vm2238 = vcmp.ne.s32.totalorder %v2118, 0
      %vm2239 = vcmp.ne.s32.totalorder %v2119, 0
      %vm2240 = vcmp.ne.s32.totalorder %v2120, 0
      %vm2241 = vcmp.ne.s32.totalorder %v2121, 0
      %vm2242 = vcmp.ne.s32.totalorder %v2122, 0
      %vm2243 = vcmp.ne.s32.totalorder %v2123, 0
      %vm2244 = vcmp.ne.s32.totalorder %v2124, 0
      %vm2245 = vcmp.ne.s32.totalorder %v2125, 0
      %vm2246 = vcmp.ne.s32.totalorder %v2126, 0
      %vm2247 = vcmp.ne.s32.totalorder %v2127, 0
      %vm2248 = vcmp.ne.s32.totalorder %v2128, 0
      %vm2249 = vcmp.ne.s32.totalorder %v2129, 0
      %vm2250 = vcmp.ne.s32.totalorder %v2130, 0
      %vm2251 = vcmp.ne.s32.totalorder %v2131, 0
      %vm2252 = vcmp.ne.s32.totalorder %v2132, 0
      %vm2253 = vcmp.ne.s32.totalorder %v2133, 0
      %vm2254 = vcmp.ne.s32.totalorder %v2134, 0
      %vm2255 = vcmp.ne.s32.totalorder %v2135, 0
      %vm2256 = vcmp.ne.s32.totalorder %v2136, 0
      %vm2257 = vcmp.ne.s32.totalorder %v2137, 0
      %vm2258 = vcmp.ne.s32.totalorder %v2138, 0
      %vm2259 = vcmp.ne.s32.totalorder %v2139, 0
      %vm2260 = vcmp.ne.s32.totalorder %v2140, 0
      %vm2261 = vcmp.ne.s32.totalorder %v2141, 0
      %vm2262 = vcmp.ne.s32.totalorder %v2142, 0
      %vm2263 = vcmp.ne.s32.totalorder %v2143, 0
      %vm2264 = vcmp.ne.s32.totalorder %v2144, 0
      %vm2265 = vcmp.ne.s32.totalorder %v2145, 0
      %vm2266 = vcmp.ne.s32.totalorder %v2146, 0
      %vm2267 = vcmp.ne.s32.totalorder %v2147, 0
      %vm2268 = vcmp.ne.s32.totalorder %v2148, 0
      %vm2269 = vcmp.ne.s32.totalorder %v2149, 0
      %vm2270 = vcmp.ne.s32.totalorder %v2150, 0
      %vm2271 = vcmp.ne.s32.totalorder %v2151, 0
      %vm2272 = vcmp.ne.s32.totalorder %v2152, 0
      %vm2273 = vcmp.ne.s32.totalorder %v2153, 0
      %vm2274 = vcmp.ne.s32.totalorder %v2154, 0
      %vm2275 = vcmp.ne.s32.totalorder %v2155, 0
      %vm2276 = vcmp.ne.s32.totalorder %v2156, 0
      %vm2277 = vcmp.ne.s32.totalorder %v2157, 0
      %vm2278 = vcmp.ne.s32.totalorder %v2158, 0
      %vm2279 = vcmp.ne.s32.totalorder %v2159, 0
      %vm2280 = vcmp.ne.s32.totalorder %v2160, 0
      %vm2281 = vcmp.ne.s32.totalorder %v2161, 0
      %vm2282 = vcmp.ne.s32.totalorder %v2162, 0
      %vm2283 = vcmp.ne.s32.totalorder %v2163, 0
      %vm2284 = vcmp.ne.s32.totalorder %v2164, 0
      %vm2285 = vcmp.ne.s32.totalorder %v2165, 0
      %vm2286 = vcmp.ne.s32.totalorder %v2166, 0
      %v2287 = vsel %vm2167, %v1807, 0.0
      %v2288 = vsel %vm2168, %v1808, 0.0
      %v2289 = vsel %vm2169, %v1809, 0.0
      %v2290 = vsel %vm2170, %v1810, 0.0
      %v2291 = vsel %vm2171, %v1811, 0.0
      %v2292 = vsel %vm2172, %v1812, 0.0
      %v2293 = vsel %vm2173, %v1813, 0.0
      %v2294 = vsel %vm2174, %v1814, 0.0
      %v2295 = vsel %vm2175, %v1815, 0.0
      %v2296 = vsel %vm2176, %v1816, 0.0
      %v2297 = vsel %vm2177, %v1817, 0.0
      %v2298 = vsel %vm2178, %v1818, 0.0
      %v2299 = vsel %vm2179, %v1819, 0.0
      %v2300 = vsel %vm2180, %v1820, 0.0
      %v2301 = vsel %vm2181, %v1821, 0.0
      %v2302 = vsel %vm2182, %v1822, 0.0
      %v2303 = vsel %vm2183, %v1823, 0.0
      %v2304 = vsel %vm2184, %v1824, 0.0
      %v2305 = vsel %vm2185, %v1825, 0.0
      %v2306 = vsel %vm2186, %v1826, 0.0
      %v2307 = vsel %vm2187, %v1827, 0.0
      %v2308 = vsel %vm2188, %v1828, 0.0
      %v2309 = vsel %vm2189, %v1829, 0.0
      %v2310 = vsel %vm2190, %v1830, 0.0
      %v2311 = vsel %vm2191, %v1831, 0.0
      %v2312 = vsel %vm2192, %v1832, 0.0
      %v2313 = vsel %vm2193, %v1833, 0.0
      %v2314 = vsel %vm2194, %v1834, 0.0
      %v2315 = vsel %vm2195, %v1835, 0.0
      %v2316 = vsel %vm2196, %v1836, 0.0
      %v2317 = vsel %vm2197, %v1837, 0.0
      %v2318 = vsel %vm2198, %v1838, 0.0
      %v2319 = vsel %vm2199, %v1839, 0.0
      %v2320 = vsel %vm2200, %v1840, 0.0
      %v2321 = vsel %vm2201, %v1841, 0.0
      %v2322 = vsel %vm2202, %v1842, 0.0
      %v2323 = vsel %vm2203, %v1843, 0.0
      %v2324 = vsel %vm2204, %v1844, 0.0
      %v2325 = vsel %vm2205, %v1845, 0.0
      %v2326 = vsel %vm2206, %v1846, 0.0
      %v2327 = vsel %vm2207, %v1847, 0.0
      %v2328 = vsel %vm2208, %v1848, 0.0
      %v2329 = vsel %vm2209, %v1849, 0.0
      %v2330 = vsel %vm2210, %v1850, 0.0
      %v2331 = vsel %vm2211, %v1851, 0.0
      %v2332 = vsel %vm2212, %v1852, 0.0
      %v2333 = vsel %vm2213, %v1853, 0.0
      %v2334 = vsel %vm2214, %v1854, 0.0
      %v2335 = vsel %vm2215, %v1855, 0.0
      %v2336 = vsel %vm2216, %v1856, 0.0
      %v2337 = vsel %vm2217, %v1857, 0.0
      %v2338 = vsel %vm2218, %v1858, 0.0
      %v2339 = vsel %vm2219, %v1859, 0.0
      %v2340 = vsel %vm2220, %v1860, 0.0
      %v2341 = vsel %vm2221, %v1861, 0.0
      %v2342 = vsel %vm2222, %v1862, 0.0
      %v2343 = vsel %vm2223, %v1863, 0.0
      %v2344 = vsel %vm2224, %v1864, 0.0
      %v2345 = vsel %vm2225, %v1865, 0.0
      %v2346 = vsel %vm2226, %v1866, 0.0
      %v2347 = vsel %vm2227, %v1867, 0.0
      %v2348 = vsel %vm2228, %v1868, 0.0
      %v2349 = vsel %vm2229, %v1869, 0.0
      %v2350 = vsel %vm2230, %v1870, 0.0
      %v2351 = vsel %vm2231, %v1871, 0.0
      %v2352 = vsel %vm2232, %v1872, 0.0
      %v2353 = vsel %vm2233, %v1873, 0.0
      %v2354 = vsel %vm2234, %v1874, 0.0
      %v2355 = vsel %vm2235, %v1875, 0.0
      %v2356 = vsel %vm2236, %v1876, 0.0
      %v2357 = vsel %vm2237, %v1877, 0.0
      %v2358 = vsel %vm2238, %v1878, 0.0
      %v2359 = vsel %vm2239, %v1879, 0.0
      %v2360 = vsel %vm2240, %v1880, 0.0
      %v2361 = vsel %vm2241, %v1881, 0.0
      %v2362 = vsel %vm2242, %v1882, 0.0
      %v2363 = vsel %vm2243, %v1883, 0.0
      %v2364 = vsel %vm2244, %v1884, 0.0
      %v2365 = vsel %vm2245, %v1885, 0.0
      %v2366 = vsel %vm2246, %v1886, 0.0
      %v2367 = vsel %vm2247, %v1887, 0.0
      %v2368 = vsel %vm2248, %v1888, 0.0
      %v2369 = vsel %vm2249, %v1889, 0.0
      %v2370 = vsel %vm2250, %v1890, 0.0
      %v2371 = vsel %vm2251, %v1891, 0.0
      %v2372 = vsel %vm2252, %v1892, 0.0
      %v2373 = vsel %vm2253, %v1893, 0.0
      %v2374 = vsel %vm2254, %v1894, 0.0
      %v2375 = vsel %vm2255, %v1895, 0.0
      %v2376 = vsel %vm2256, %v1896, 0.0
      %v2377 = vsel %vm2257, %v1897, 0.0
      %v2378 = vsel %vm2258, %v1898, 0.0
      %v2379 = vsel %vm2259, %v1899, 0.0
      %v2380 = vsel %vm2260, %v1900, 0.0
      %v2381 = vsel %vm2261, %v1901, 0.0
      %v2382 = vsel %vm2262, %v1902, 0.0
      %v2383 = vsel %vm2263, %v1903, 0.0
      %v2384 = vsel %vm2264, %v1904, 0.0
      %v2385 = vsel %vm2265, %v1905, 0.0
      %v2386 = vsel %vm2266, %v1906, 0.0
      %v2387 = vsel %vm2267, %v1907, 0.0
      %v2388 = vsel %vm2268, %v1908, 0.0
      %v2389 = vsel %vm2269, %v1909, 0.0
      %v2390 = vsel %vm2270, %v1910, 0.0
      %v2391 = vsel %vm2271, %v1911, 0.0
      %v2392 = vsel %vm2272, %v1912, 0.0
      %v2393 = vsel %vm2273, %v1913, 0.0
      %v2394 = vsel %vm2274, %v1914, 0.0
      %v2395 = vsel %vm2275, %v1915, 0.0
      %v2396 = vsel %vm2276, %v1916, 0.0
      %v2397 = vsel %vm2277, %v1917, 0.0
      %v2398 = vsel %vm2278, %v1918, 0.0
      %v2399 = vsel %vm2279, %v1919, 0.0
      %v2400 = vsel %vm2280, %v1920, 0.0
      %v2401 = vsel %vm2281, %v1921, 0.0
      %v2402 = vsel %vm2282, %v1922, 0.0
      %v2403 = vsel %vm2283, %v1923, 0.0
      %v2404 = vsel %vm2284, %v1924, 0.0
      %v2405 = vsel %vm2285, %v1925, 0.0
      %v2406 = vsel %vm2286, %v1926, 0.0
      %2407 = vst [vmem:[%s181] sm:$0xff] %v2287
      %2408 = vst [vmem:[%s181 + $0x8] sm:$0xff] %v2288
      %2409 = vst [vmem:[%s181 + $0x10] sm:$0xff] %v2289
      %2410 = vst [vmem:[%s181 + $0x18] sm:$0xff] %v2290
      %2411 = vst [vmem:[%s181 + $0x20] sm:$0xff] %v2291
      %2412 = vst [vmem:[%s181 + $0x28] sm:$0xff] %v2292
      %2413 = vst [vmem:[%s181 + $0x30] sm:$0xff] %v2293
      %2414 = vst [vmem:[%s181 + $0x38] sm:$0xff] %v2294
      %2415 = vst [vmem:[%s181 + $0x40] sm:$0xff] %v2295
      %2416 = vst [vmem:[%s181 + $0x48] sm:$0xff] %v2296
      %2417 = vst [vmem:[%s181 + $0x50] sm:$0xff] %v2297
      %2418 = vst [vmem:[%s181 + $0x58] sm:$0xff] %v2298
      %2419 = vst [vmem:[%s181 + $0x60] sm:$0xff] %v2299
      %2420 = vst [vmem:[%s181 + $0x68] sm:$0xff] %v2300
      %2421 = vst [vmem:[%s181 + $0x70] sm:$0xff] %v2301
      %2422 = vst [vmem:[%s181 + $0x78] sm:$0xff] %v2302
      %2423 = vst [vmem:[%s181 + $0x80] sm:$0xff] %v2303
      %2424 = vst [vmem:[%s181 + $0x88] sm:$0xff] %v2304
      %2425 = vst [vmem:[%s181 + $0x90] sm:$0xff] %v2305
      %2426 = vst [vmem:[%s181 + $0x98] sm:$0xff] %v2306
      %2427 = vst [vmem:[%s181 + $0xa0] sm:$0xff] %v2307
      %2428 = vst [vmem:[%s181 + $0xa8] sm:$0xff] %v2308
      %2429 = vst [vmem:[%s181 + $0xb0] sm:$0xff] %v2309
      %2430 = vst [vmem:[%s181 + $0xb8] sm:$0xff] %v2310
      %2431 = vst [vmem:[%s181 + $0xc0] sm:$0xff] %v2311
      %2432 = vst [vmem:[%s181 + $0xc8] sm:$0xff] %v2312
      %2433 = vst [vmem:[%s181 + $0xd0] sm:$0xff] %v2313
      %2434 = vst [vmem:[%s181 + $0xd8] sm:$0xff] %v2314
      %2435 = vst [vmem:[%s181 + $0xe0] sm:$0xff] %v2315
      %2436 = vst [vmem:[%s181 + $0xe8] sm:$0xff] %v2316
      %2437 = vst [vmem:[%s181 + $0xf0] sm:$0xff] %v2317
      %2438 = vst [vmem:[%s181 + $0xf8] sm:$0xff] %v2318
      %2439 = vst [vmem:[%s181 + $0x100] sm:$0xff] %v2319
      %2440 = vst [vmem:[%s181 + $0x108] sm:$0xff] %v2320
      %2441 = vst [vmem:[%s181 + $0x110] sm:$0xff] %v2321
      %2442 = vst [vmem:[%s181 + $0x118] sm:$0xff] %v2322
      %2443 = vst [vmem:[%s181 + $0x120] sm:$0xff] %v2323
      %2444 = vst [vmem:[%s181 + $0x128] sm:$0xff] %v2324
      %2445 = vst [vmem:[%s181 + $0x130] sm:$0xff] %v2325
      %2446 = vst [vmem:[%s181 + $0x138] sm:$0xff] %v2326
      %2447 = vst [vmem:[%s181 + $0x140] sm:$0xff] %v2327
      %2448 = vst [vmem:[%s181 + $0x148] sm:$0xff] %v2328
      %2449 = vst [vmem:[%s181 + $0x150] sm:$0xff] %v2329
      %2450 = vst [vmem:[%s181 + $0x158] sm:$0xff] %v2330
      %2451 = vst [vmem:[%s181 + $0x160] sm:$0xff] %v2331
      %2452 = vst [vmem:[%s181 + $0x168] sm:$0xff] %v2332
      %2453 = vst [vmem:[%s181 + $0x170] sm:$0xff] %v2333
      %2454 = vst [vmem:[%s181 + $0x178] sm:$0xff] %v2334
      %2455 = vst [vmem:[%s181 + $0x180] sm:$0xff] %v2335
      %2456 = vst [vmem:[%s181 + $0x188] sm:$0xff] %v2336
      %2457 = vst [vmem:[%s181 + $0x190] sm:$0xff] %v2337
      %2458 = vst [vmem:[%s181 + $0x198] sm:$0xff] %v2338
      %2459 = vst [vmem:[%s181 + $0x1a0] sm:$0xff] %v2339
      %2460 = vst [vmem:[%s181 + $0x1a8] sm:$0xff] %v2340
      %2461 = vst [vmem:[%s181 + $0x1b0] sm:$0xff] %v2341
      %2462 = vst [vmem:[%s181 + $0x1b8] sm:$0xff] %v2342
      %2463 = vst [vmem:[%s181 + $0x1c0] sm:$0xff] %v2343
      %2464 = vst [vmem:[%s181 + $0x1c8] sm:$0xff] %v2344
      %2465 = vst [vmem:[%s181 + $0x1d0] sm:$0xff] %v2345
      %2466 = vst [vmem:[%s181 + $0x1d8] sm:$0xff] %v2346
      %2467 = vst [vmem:[%s181 + $0x1e0] sm:$0xff] %v2347
      %2468 = vst [vmem:[%s181 + $0x1e8] sm:$0xff] %v2348
      %2469 = vst [vmem:[%s181 + $0x1f0] sm:$0xff] %v2349
      %2470 = vst [vmem:[%s181 + $0x1f8] sm:$0xff] %v2350
      %2471 = vst [vmem:[%s181 + $0x200] sm:$0xff] %v2351
      %2472 = vst [vmem:[%s181 + $0x208] sm:$0xff] %v2352
      %2473 = vst [vmem:[%s181 + $0x210] sm:$0xff] %v2353
      %2474 = vst [vmem:[%s181 + $0x218] sm:$0xff] %v2354
      %2475 = vst [vmem:[%s181 + $0x220] sm:$0xff] %v2355
      %2476 = vst [vmem:[%s181 + $0x228] sm:$0xff] %v2356
      %2477 = vst [vmem:[%s181 + $0x230] sm:$0xff] %v2357
      %2478 = vst [vmem:[%s181 + $0x238] sm:$0xff] %v2358
      %2479 = vst [vmem:[%s181 + $0x240] sm:$0xff] %v2359
      %2480 = vst [vmem:[%s181 + $0x248] sm:$0xff] %v2360
      %2481 = vst [vmem:[%s181 + $0x250] sm:$0xff] %v2361
      %2482 = vst [vmem:[%s181 + $0x258] sm:$0xff] %v2362
      %2483 = vst [vmem:[%s181 + $0x260] sm:$0xff] %v2363
      %2484 = vst [vmem:[%s181 + $0x268] sm:$0xff] %v2364
      %2485 = vst [vmem:[%s181 + $0x270] sm:$0xff] %v2365
      %2486 = vst [vmem:[%s181 + $0x278] sm:$0xff] %v2366
      %2487 = vst [vmem:[%s181 + $0x280] sm:$0xff] %v2367
      %2488 = vst [vmem:[%s181 + $0x288] sm:$0xff] %v2368
      %2489 = vst [vmem:[%s181 + $0x290] sm:$0xff] %v2369
      %2490 = vst [vmem:[%s181 + $0x298] sm:$0xff] %v2370
      %2491 = vst [vmem:[%s181 + $0x2a0] sm:$0xff] %v2371
      %2492 = vst [vmem:[%s181 + $0x2a8] sm:$0xff] %v2372
      %2493 = vst [vmem:[%s181 + $0x2b0] sm:$0xff] %v2373
      %2494 = vst [vmem:[%s181 + $0x2b8] sm:$0xff] %v2374
      %2495 = vst [vmem:[%s181 + $0x2c0] sm:$0xff] %v2375
      %2496 = vst [vmem:[%s181 + $0x2c8] sm:$0xff] %v2376
      %2497 = vst [vmem:[%s181 + $0x2d0] sm:$0xff] %v2377
      %2498 = vst [vmem:[%s181 + $0x2d8] sm:$0xff] %v2378
      %2499 = vst [vmem:[%s181 + $0x2e0] sm:$0xff] %v2379
      %2500 = vst [vmem:[%s181 + $0x2e8] sm:$0xff] %v2380
      %2501 = vst [vmem:[%s181 + $0x2f0] sm:$0xff] %v2381
      %2502 = vst [vmem:[%s181 + $0x2f8] sm:$0xff] %v2382
      %2503 = vst [vmem:[%s181 + $0x300] sm:$0xff] %v2383
      %2504 = vst [vmem:[%s181 + $0x308] sm:$0xff] %v2384
      %2505 = vst [vmem:[%s181 + $0x310] sm:$0xff] %v2385
      %2506 = vst [vmem:[%s181 + $0x318] sm:$0xff] %v2386
      %2507 = vst [vmem:[%s181 + $0x320] sm:$0xff] %v2387
      %2508 = vst [vmem:[%s181 + $0x328] sm:$0xff] %v2388
      %2509 = vst [vmem:[%s181 + $0x330] sm:$0xff] %v2389
      %2510 = vst [vmem:[%s181 + $0x338] sm:$0xff] %v2390
      %2511 = vst [vmem:[%s181 + $0x340] sm:$0xff] %v2391
      %2512 = vst [vmem:[%s181 + $0x348] sm:$0xff] %v2392
      %2513 = vst [vmem:[%s181 + $0x350] sm:$0xff] %v2393
      %2514 = vst [vmem:[%s181 + $0x358] sm:$0xff] %v2394
      %2515 = vst [vmem:[%s181 + $0x360] sm:$0xff] %v2395
      %2516 = vst [vmem:[%s181 + $0x368] sm:$0xff] %v2396
      %2517 = vst [vmem:[%s181 + $0x370] sm:$0xff] %v2397
      %2518 = vst [vmem:[%s181 + $0x378] sm:$0xff] %v2398
      %2519 = vst [vmem:[%s181 + $0x380] sm:$0xff] %v2399
      %2520 = vst [vmem:[%s181 + $0x388] sm:$0xff] %v2400
      %2521 = vst [vmem:[%s181 + $0x390] sm:$0xff] %v2401
      %2522 = vst [vmem:[%s181 + $0x398] sm:$0xff] %v2402
      %2523 = vst [vmem:[%s181 + $0x3a0] sm:$0xff] %v2403
      %2524 = vst [vmem:[%s181 + $0x3a8] sm:$0xff] %v2404
      %2525 = vst [vmem:[%s181 + $0x3b0] sm:$0xff] %v2405
      %2526 = vst [vmem:[%s181 + $0x3b8] sm:$0xff] %v2406
      %s2527 = smul.u32 24, %s39
      %p2528 = scmp.lt.s32.totalorder %s38, 1
      %s2529 = scalar_select %p2528, %s38, 1
      %p2530 = scmp.lt.s32.totalorder %s2527, 23
      %s2531 = scalar_select %p2530, %s2527, 23
      %s2532 = smul.addr %s2531, 5
      %s2533 = smul.addr %s2529, 120
      %s2534 = sadd.s32 %s2532, %s2533
      %s2535 = smul.addr %s2534, 8
      %s2536 = scalar_lea.vmem %s5, %s2535
      // Predicated region
      $region25: #{apply_spec_augment.1} parent=23 // pred_check
        %p2537 = pneg %p94
      $region26: #{apply_spec_augment.1} parent=23 // pred_check_branch
        %2539 = sbr.rel (%p2537) target = $region28
      $region27: #{apply_spec_augment.1} parent=23 // pred_region
        %s2540 = smul.u32 24, %s39
      $region28: #{apply_spec_augment.1} parent=23 // pred_fallthru
        _
    $region24: #{apply_spec_augment.1} parent=5 // pred_fallthru
      _
    %p2541 = scmp.le.s32.totalorder 2, %s29
    // Predicated region
    $region29: #{apply_spec_augment.1} parent=5 // pred_check
      %p2542 = pneg %p2541
    $region30: #{apply_spec_augment.1} parent=5 // pred_check_branch
      %2544 = sbr.rel (%p2542) target = $region32
    $region31: #{apply_spec_augment.1} parent=5 // pred_region
      %s2545 = ssub.s32 %s29, 2
      // Predicated region
      $region33: #{apply_spec_augment.1} parent=31 // pred_check
        %p2546 = pneg %p100
      $region34: #{apply_spec_augment.1} parent=31 // pred_check_branch
        %2548 = sbr.rel (%p2546) target = $region36
      $region35: #{apply_spec_augment.1} parent=31 // pred_region
        %s2549 = smul.u32 24, %s41
        %p2550 = scmp.lt.s32.totalorder %s40, 1
        %s2551 = scalar_select %p2550, %s40, 1
        %p2552 = scmp.lt.s32.totalorder %s2549, 23
        %s2553 = scalar_select %p2552, %s2549, 23
        %s2554 = smul.addr %s2553, 5
        %s2555 = smul.addr %s2551, 120
        %s2556 = sadd.s32 %s2554, %s2555
        %s2557 = smul.addr %s2556, 8
        %s2558 = scalar_lea.vmem %s5, %s2557
      $region36: #{apply_spec_augment.1} parent=31 // pred_fallthru
        _
    $region32: #{apply_spec_augment.1} parent=5 // pred_fallthru
      _
  $region6: #{apply_spec_augment.1} parent=0 // loop_footer
    %s33 = sadd.s32 1, %s29
  $region7: #{apply_spec_augment.1} parent=0 // loop_footer_branch
    %28 = sbr.rel target = $region3
  $region8: #{apply_spec_augment.1} parent=0 // loop_exit
    _

</llo_original>
